<compile_context>
chip_gen: v7x
topology: tpu7x:2x2x1
jax: 0.10.0
libtpu: 0.0.40
codegen_flags: <defaults>
</compile_context>

<pallas_src>
import jax
import jax.numpy as jnp
import numpy as np
from jax import lax
from jax.experimental import pallas as pl
from jax.experimental.pallas import tpu as pltpu

K_SA = 7      # spatial-attention kernel size
PAD_SA = 3    # padding of the 7x7 conv
MTOP = 8      # zero rows above the stacked map (>= PAD_SA, 8 keeps rows aligned)


def _round_up(v, m):
    return ((v + m - 1) // m) * m


def _roll_lanes(v, k):
    """Lane rotation: result[..., j] = v[..., (j + k) % L].

    Implemented with pltpu.roll (np.roll semantics: out[j] = in[(j - shift) % L]),
    so the required shift is (-k) % L.  One XLU rotate per vreg, no VALU/select.
    """
    L = v.shape[-1]
    s = (-k) % L
    if s == 0:
        return v
    return pltpu.roll(v, s, axis=v.ndim - 1)


def _cbam_kernel(x_ref, w1_ref, w2_ref, fold_ref, sel_ref, selmax_ref, band_ref,
                 y_ref):
    # x_ref      : (H, W*C)          VMEM  activations (batch dim squeezed away)
    # w1_ref     : (C, Cr)           VMEM  first 1x1 conv of the shared MLP (transposed)
    # w2_ref     : (Cr, C)           VMEM  second 1x1 conv (transposed)
    # fold_ref   : (W*C, C)          VMEM  0/1 matrix, fold[j, c]    = (j % C == c)
    # sel_ref    : (W*C, Wpad)       VMEM  0/1 matrix, sel[j, w]     = (j // C == w)
    # selmax_ref : (W*C, Wpad)       VMEM  0/1 matrix, sel_max[j, w] = (j == w*C)
    # band_ref   : (7, H, Rows)      VMEM  banded 7x7 conv weights, one band per kw
    # y_ref      : (H, W*C)          VMEM
    H, WC = x_ref.shape
    C = w1_ref.shape[0]
    W = WC // C
    Wpad = sel_ref.shape[1]
    Hband = _round_up(H + PAD_SA, 8)

    x = x_ref[...].astype(jnp.float32)                  # (H, WC), lane-dense
    fold = fold_ref[...]                                # (WC, C)
    sel = sel_ref[...]                                  # (WC, Wpad)
    dn_t = (((1,), (1,)), ((), ()))                     # contract last dims (A @ B.T)

    # ---------------- Channel attention ----------------
    # Global average pool: short sublane sum over H, then MXU fold over the W groups.
    colsum = jnp.sum(x, axis=0, keepdims=True)                              # (1, WC)
    avg_pool = jnp.dot(colsum, fold,
                       preferred_element_type=jnp.float32) * (1.0 / (H * W))  # (1, C)

    # Global max pool: log2(W) lane roll-folds over the W channel groups, then a
    # sublane max; lanes 0:C hold the per-channel global max.
    xm = x
    s = C
    while s < WC:
        xm = jnp.maximum(xm, _roll_lanes(xm, s))
        s *= 2
    max_pool = jnp.max(xm, axis=0, keepdims=True)[:, 0:C]                   # (1, C)

    pooled = jnp.concatenate([avg_pool, max_pool], axis=0)                  # (2, C)
    hidden = jnp.maximum(
        jnp.dot(pooled, w1_ref[...], preferred_element_type=jnp.float32), 0.0)
    mlp = jnp.dot(hidden, w2_ref[...], preferred_element_type=jnp.float32)
    ca = jax.nn.sigmoid(mlp[0:1, :] + mlp[1:2, :])                          # (1, C)

    # Tile ca along lanes without a relayout: ca_tiled[0, j] = ca[0, j % C]  (MXU).
    ca_tiled = lax.dot_general(ca, fold, dn_t,
                               preferred_element_type=jnp.float32)          # (1, WC)
    x_ca = x * ca_tiled                                                     # (H, WC)

    # ---------------- Spatial attention ----------------
    # Per-pixel channel mean on the MXU: ch_avg[h, w] = (1/C) * sum_c x_ca[h, w*C+c].
    ch_avg = jnp.dot(x_ca, sel,
                     preferred_element_type=jnp.float32) * (1.0 / C)        # (H, Wpad)

    # Per-pixel channel max: log2(C) lane roll-fold; the exact group max lands on
    # lanes j % C == 0 and is extracted with sel_max on the MXU (no mask multiply).
    m = x_ca
    s = 1
    while s < C:                                   # C asserted to be a power of two
        m = jnp.maximum(m, _roll_lanes(m, s))
        s *= 2
    ch_max = jnp.dot(m, selmax_ref[...],
                     preferred_element_type=jnp.float32)                    # (H, Wpad)

    # Zero-padded, stacked (avg | max) map.  Maps sit at lane offset 0 and row
    # offsets MTOP / MTOP + Hband; every margin is >= PAD_SA wide and zero, so the
    # banded conv taps never need masking (columns >= W of ch_avg/ch_max are 0).
    ztop = jnp.zeros((MTOP, Wpad), jnp.float32)
    zgap = jnp.zeros((Hband - H, Wpad), jnp.float32)
    P = jnp.concatenate([ztop, ch_avg, zgap, ch_max, zgap], axis=0)  # (Rows, Wpad)

    # 7x7 conv as 7 banded MXU matmuls: one lane roll per kw (shared by both input
    # channels and all kh), then acc += Wband[kw] @ Pk.
    acc = jnp.zeros((H, Wpad), jnp.float32)
    for kw in range(K_SA):
        Pk = _roll_lanes(P, kw - PAD_SA)           # Pk[:, w] = P[:, w + kw - PAD_SA]
        acc = acc + jnp.dot(band_ref[kw], Pk,
                            preferred_element_type=jnp.float32)
    sa = jax.nn.sigmoid(acc)                                                # (H, Wpad)

    # Broadcast sa back to the packed layout: sa_exp[h, j] = sa[h, j // C]  (MXU).
    sa_exp = lax.dot_general(sa, sel, dn_t,
                             preferred_element_type=jnp.float32)            # (H, WC)

    # Fused residual: y = x_ca + x_ca * sa == x_ca * (1 + sa).
    y_ref[...] = (x_ca * (1.0 + sa_exp)).astype(y_ref.dtype)


def _build_host_constants(H, W, C, Wpad, Hband):
    """Shape-derived 0/1 matrices + the band-placement one-hot, built once (numpy)."""
    WC = W * C
    rows = MTOP + 2 * Hband
    j = np.arange(WC)
    fold = np.asarray(j[:, None] % C == np.arange(C)[None, :], dtype=np.float32)
    sel = np.asarray(j[:, None] // C == np.arange(Wpad)[None, :], dtype=np.float32)
    sel_max = np.asarray(j[:, None] == np.arange(Wpad)[None, :] * C, dtype=np.float32)
    # onehot[c, kh, h, r] = 1  iff  r == MTOP + c*Hband - PAD_SA + kh + h
    onehot = np.zeros((2, K_SA, H, rows), np.float32)
    for c in range(2):
        base = MTOP + c * Hband - PAD_SA
        for kh in range(K_SA):
            for h in range(H):
                onehot[c, kh, h, base + kh + h] = 1.0
    return fold, sel, sel_max, onehot


@jax.jit
def cbam_pallas(x, w1, w2, w_sa):
    """x: (B, H, W, C) f32 NHWC; w1: (C, C//r); w2: (C//r, C); w_sa: (2, 7, 7)."""
    B, H, W, C = x.shape
    Cr = w1.shape[1]
    WC = W * C
    Wpad = _round_up(W + PAD_SA, 128)
    Hband = _round_up(H + PAD_SA, 8)
    rows = MTOP + 2 * Hband
    assert C >= 1 and (C & (C - 1)) == 0, "channel count must be a power of two"
    assert Wpad - W >= PAD_SA, "lane margin must cover the circular kw roll"
    assert Hband - H >= PAD_SA and MTOP >= PAD_SA, "row margins must cover kh taps"

    fold_np, sel_np, selmax_np, onehot_np = _build_host_constants(H, W, C, Wpad, Hband)
    fold_mat = jnp.asarray(fold_np)                # (WC, C)
    sel_mat = jnp.asarray(sel_np)                  # (WC, Wpad)
    selmax_mat = jnp.asarray(selmax_np)            # (WC, Wpad)
    # Banded conv weights, one (H, rows) band per kw: band[kw] @ P == 7x7 conv taps.
    band = jnp.einsum("ckq,ckhr->qhr",
                      w_sa.astype(jnp.float32), jnp.asarray(onehot_np))  # (7, H, rows)

    x2 = x.reshape(B, H, WC)                       # free metadata reshape, lane-dense

    grid_spec = pltpu.PrefetchScalarGridSpec(
        num_scalar_prefetch=0,
        grid=(B,),
        in_specs=[
            pl.BlockSpec((pl.Squeezed(), H, WC), lambda b: (b, 0, 0)),
            pl.BlockSpec((C, Cr), lambda b: (0, 0)),
            pl.BlockSpec((Cr, C), lambda b: (0, 0)),
            pl.BlockSpec((WC, C), lambda b: (0, 0)),
            pl.BlockSpec((WC, Wpad), lambda b: (0, 0)),
            pl.BlockSpec((WC, Wpad), lambda b: (0, 0)),
            pl.BlockSpec((K_SA, H, rows), lambda b: (0, 0, 0)),
        ],
        out_specs=pl.BlockSpec((pl.Squeezed(), H, WC), lambda b: (b, 0, 0)),
    )
    y2 = pl.pallas_call(
        _cbam_kernel,
        out_shape=jax.ShapeDtypeStruct((B, H, WC), x.dtype),
        grid_spec=grid_spec,
        compiler_params=pltpu.CompilerParams(
            dimension_semantics=("parallel",)),
    )(x2, w1, w2, fold_mat, sel_mat, selmax_mat, band)
    return y2.reshape(B, H, W, C)


def cbam_reference(x, w1, w2, w_sa):
    """Pure-JAX reference matching the PyTorch _CBAM forward (NHWC layout)."""
    avg = jnp.mean(x, axis=(1, 2))                         # (B, C)
    mx = jnp.max(x, axis=(1, 2))                           # (B, C)

    def mlp(p):
        return jnp.maximum(p @ w1, 0.0) @ w2

    ca = jax.nn.sigmoid(mlp(avg) + mlp(mx))                # (B, C)
    x_ca = x * ca[:, None, None, :]

    ch_avg = jnp.mean(x_ca, axis=-1)                       # (B, H, W)
    ch_max = jnp.max(x_ca, axis=-1)
    maps = jnp.stack([ch_avg, ch_max], axis=-1)            # (B, H, W, 2)
    w_hwio = jnp.transpose(w_sa, (1, 2, 0))[:, :, :, None]  # (7, 7, 2, 1)
    sa = jax.lax.conv_general_dilated(
        maps, w_hwio, window_strides=(1, 1),
        padding=((PAD_SA, PAD_SA), (PAD_SA, PAD_SA)),
        dimension_numbers=("NHWC", "HWIO", "NHWC"))
    sa = jax.nn.sigmoid(sa)                                # (B, H, W, 1)
    return x_ca + x_ca * sa


if __name__ == "__main__":
    B, H, W, C = 2, 16, 16, 32
    reduction_ratio = 8
    Cr = C // reduction_ratio

    key = jax.random.PRNGKey(0)
    kx, k1, k2, k3 = jax.random.split(key, 4)

    # NHWC activations (the PyTorch module is NCHW; an NCHW input would just be
    # transposed to NHWC before calling the wrapper).
    x = jax.random.normal(kx, (B, H, W, C), dtype=jnp.float32)
    w1 = jax.random.normal(k1, (C, Cr), dtype=jnp.float32) * 0.1      # 1x1 conv #1
    w2 = jax.random.normal(k2, (Cr, C), dtype=jnp.float32) * 0.1      # 1x1 conv #2
    w_sa = jax.random.normal(k3, (2, K_SA, K_SA), dtype=jnp.float32) * 0.1  # 7x7 conv

    y = jax.block_until_ready(cbam_pallas(x, w1, w2, w_sa))

    y_ref = cbam_reference(x, w1, w2, w_sa)
    np.testing.assert_allclose(np.asarray(y), np.asarray(y_ref),
                               atol=2e-4, rtol=2e-4)
    print("KERNEL_OK")
</pallas_src>

<mosaic_0001>
module attributes {stable_mosaic.version = 11 : i64} {
  func.func @_cbam_kernel(%arg0: i32, %arg1: memref<1x16x512xf32, #tpu.memory_space<vmem>>, %arg2: memref<32x4xf32, #tpu.memory_space<vmem>>, %arg3: memref<4x32xf32, #tpu.memory_space<vmem>>, %arg4: memref<512x32xf32, #tpu.memory_space<vmem>>, %arg5: memref<512x128xf32, #tpu.memory_space<vmem>>, %arg6: memref<512x128xf32, #tpu.memory_space<vmem>>, %arg7: memref<7x16x56xf32, #tpu.memory_space<vmem>>, %arg8: memref<1x16x512xf32, #tpu.memory_space<vmem>>) attributes {dimension_semantics = [#tpu.dimension_semantics<parallel>], iteration_bounds = array<i64: 2>, scalar_prefetch = 0 : i64, scratch_operands = 0 : i64, tpu.core_type = #tpu.core_type<tc>, window_params = [{transform_indices = @transform_0, window_bounds = array<i64: 1, 16, 512>}, {pipeline_mode = #tpu.pipeline_mode<synchronous>, transform_indices = @transform_1, window_bounds = array<i64: 32, 4>}, {pipeline_mode = #tpu.pipeline_mode<synchronous>, transform_indices = @transform_2, window_bounds = array<i64: 4, 32>}, {pipeline_mode = #tpu.pipeline_mode<synchronous>, transform_indices = @transform_3, window_bounds = array<i64: 512, 32>}, {pipeline_mode = #tpu.pipeline_mode<synchronous>, transform_indices = @transform_4, window_bounds = array<i64: 512, 128>}, {pipeline_mode = #tpu.pipeline_mode<synchronous>, transform_indices = @transform_5, window_bounds = array<i64: 512, 128>}, {pipeline_mode = #tpu.pipeline_mode<synchronous>, transform_indices = @transform_6, window_bounds = array<i64: 7, 16, 56>}, {transform_indices = @transform_7, window_bounds = array<i64: 1, 16, 512>}]} {
    %c0 = arith.constant 0 : index
    %c0_0 = arith.constant 0 : index
    %c0_1 = arith.constant 0 : index
    %0 = vector.load %arg1[%c0, %c0_0, %c0_1] : memref<1x16x512xf32, #tpu.memory_space<vmem>>, vector<1x16x512xf32>
    %1 = vector.shape_cast %0 : vector<1x16x512xf32> to vector<16x512xf32>
    %c0_2 = arith.constant 0 : index
    %c0_3 = arith.constant 0 : index
    %2 = vector.load %arg4[%c0_2, %c0_3] : memref<512x32xf32, #tpu.memory_space<vmem>>, vector<512x32xf32>
    %c0_4 = arith.constant 0 : index
    %c0_5 = arith.constant 0 : index
    %3 = vector.load %arg5[%c0_4, %c0_5] : memref<512x128xf32, #tpu.memory_space<vmem>>, vector<512x128xf32>
    %cst = arith.constant dense<0.000000e+00> : vector<512xf32>
    %4 = vector.multi_reduction <add>, %1, %cst [0] : vector<16x512xf32> to vector<512xf32>
    %5 = vector.shape_cast %4 : vector<512xf32> to vector<1x512xf32>
    %cst_6 = arith.constant dense<0.000000e+00> : vector<1x32xf32>
    %6 = tpu.matmul %5, %2, %cst_6 {dimension_numbers = #tpu.dot_dimension_numbers<[1], [0], [0], [1], [0, 0, 1, 1], [], []>} : vector<1x512xf32>, vector<512x32xf32>, vector<1x32xf32> -> vector<1x32xf32>
    %cst_7 = arith.constant 3.906250e-03 : f32
    %7 = vector.broadcast %cst_7 : f32 to vector<1x32xf32>
    %8 = arith.mulf %6, %7 : vector<1x32xf32>
    %c480_i32 = arith.constant 480 : i32
    %9 = tpu.dynamic_rotate %1 by %c480_i32 dim 1 : vector<16x512xf32>, i32 -> vector<16x512xf32>
    %10 = arith.maximumf %1, %9 : vector<16x512xf32>
    %c448_i32 = arith.constant 448 : i32
    %11 = tpu.dynamic_rotate %10 by %c448_i32 dim 1 : vector<16x512xf32>, i32 -> vector<16x512xf32>
    %12 = arith.maximumf %10, %11 : vector<16x512xf32>
    %c384_i32 = arith.constant 384 : i32
    %13 = tpu.dynamic_rotate %12 by %c384_i32 dim 1 : vector<16x512xf32>, i32 -> vector<16x512xf32>
    %14 = arith.maximumf %12, %13 : vector<16x512xf32>
    %c256_i32 = arith.constant 256 : i32
    %15 = tpu.dynamic_rotate %14 by %c256_i32 dim 1 : vector<16x512xf32>, i32 -> vector<16x512xf32>
    %16 = arith.maximumf %14, %15 : vector<16x512xf32>
    %cst_8 = arith.constant dense<0xFF800000> : vector<512xf32>
    %17 = vector.multi_reduction <maximumf>, %16, %cst_8 [0] : vector<16x512xf32> to vector<512xf32>
    %18 = vector.shape_cast %17 : vector<512xf32> to vector<1x512xf32>
    %19 = vector.extract_strided_slice %18 {offsets = [0, 0], sizes = [1, 32], strides = [1, 1]} : vector<1x512xf32> to vector<1x32xf32>
    %20 = tpu.concatenate %8, %19 in 0 : vector<1x32xf32>, vector<1x32xf32> -> vector<2x32xf32>
    %c0_9 = arith.constant 0 : index
    %c0_10 = arith.constant 0 : index
    %21 = vector.load %arg2[%c0_9, %c0_10] : memref<32x4xf32, #tpu.memory_space<vmem>>, vector<32x4xf32>
    %cst_11 = arith.constant dense<0.000000e+00> : vector<2x4xf32>
    %22 = tpu.matmul %20, %21, %cst_11 {dimension_numbers = #tpu.dot_dimension_numbers<[1], [0], [0], [1], [0, 0, 1, 1], [], []>} : vector<2x32xf32>, vector<32x4xf32>, vector<2x4xf32> -> vector<2x4xf32>
    %cst_12 = arith.constant 0.000000e+00 : f32
    %23 = vector.broadcast %cst_12 : f32 to vector<2x4xf32>
    %24 = arith.maximumf %22, %23 : vector<2x4xf32>
    %c0_13 = arith.constant 0 : index
    %c0_14 = arith.constant 0 : index
    %25 = vector.load %arg3[%c0_13, %c0_14] : memref<4x32xf32, #tpu.memory_space<vmem>>, vector<4x32xf32>
    %cst_15 = arith.constant dense<0.000000e+00> : vector<2x32xf32>
    %26 = tpu.matmul %24, %25, %cst_15 {dimension_numbers = #tpu.dot_dimension_numbers<[1], [0], [0], [1], [0, 0, 1, 1], [], []>} : vector<2x4xf32>, vector<4x32xf32>, vector<2x32xf32> -> vector<2x32xf32>
    %27 = vector.extract_strided_slice %26 {offsets = [0, 0], sizes = [1, 32], strides = [1, 1]} : vector<2x32xf32> to vector<1x32xf32>
    %28 = vector.extract_strided_slice %26 {offsets = [1, 0], sizes = [1, 32], strides = [1, 1]} : vector<2x32xf32> to vector<1x32xf32>
    %29 = arith.addf %27, %28 : vector<1x32xf32>
    %30 = arith.negf %29 : vector<1x32xf32>
    %31 = math.exp %30 : vector<1x32xf32>
    %cst_16 = arith.constant 1.000000e+00 : f32
    %32 = vector.broadcast %cst_16 : f32 to vector<1x32xf32>
    %33 = arith.addf %32, %31 : vector<1x32xf32>
    %34 = arith.divf %32, %33 : vector<1x32xf32>
    %cst_17 = arith.constant dense<0.000000e+00> : vector<1x512xf32>
    %35 = tpu.matmul %34, %2, %cst_17 {dimension_numbers = #tpu.dot_dimension_numbers<[1], [1], [0], [0], [0, 0, 1, 0], [], []>} : vector<1x32xf32>, vector<512x32xf32>, vector<1x512xf32> -> vector<1x512xf32>
    %36 = vector.broadcast %35 : vector<1x512xf32> to vector<16x512xf32>
    %37 = arith.mulf %1, %36 : vector<16x512xf32>
    %cst_18 = arith.constant dense<0.000000e+00> : vector<16x128xf32>
    %38 = tpu.matmul %37, %3, %cst_18 {dimension_numbers = #tpu.dot_dimension_numbers<[1], [0], [0], [1], [0, 0, 1, 1], [], []>} : vector<16x512xf32>, vector<512x128xf32>, vector<16x128xf32> -> vector<16x128xf32>
    %cst_19 = arith.constant 3.125000e-02 : f32
    %39 = vector.broadcast %cst_19 : f32 to vector<16x128xf32>
    %40 = arith.mulf %38, %39 : vector<16x128xf32>
    %c511_i32 = arith.constant 511 : i32
    %41 = tpu.dynamic_rotate %37 by %c511_i32 dim 1 : vector<16x512xf32>, i32 -> vector<16x512xf32>
    %42 = arith.maximumf %37, %41 : vector<16x512xf32>
    %c510_i32 = arith.constant 510 : i32
    %43 = tpu.dynamic_rotate %42 by %c510_i32 dim 1 : vector<16x512xf32>, i32 -> vector<16x512xf32>
    %44 = arith.maximumf %42, %43 : vector<16x512xf32>
    %c508_i32 = arith.constant 508 : i32
    %45 = tpu.dynamic_rotate %44 by %c508_i32 dim 1 : vector<16x512xf32>, i32 -> vector<16x512xf32>
    %46 = arith.maximumf %44, %45 : vector<16x512xf32>
    %c504_i32 = arith.constant 504 : i32
    %47 = tpu.dynamic_rotate %46 by %c504_i32 dim 1 : vector<16x512xf32>, i32 -> vector<16x512xf32>
    %48 = arith.maximumf %46, %47 : vector<16x512xf32>
    %c496_i32 = arith.constant 496 : i32
    %49 = tpu.dynamic_rotate %48 by %c496_i32 dim 1 : vector<16x512xf32>, i32 -> vector<16x512xf32>
    %50 = arith.maximumf %48, %49 : vector<16x512xf32>
    %c0_20 = arith.constant 0 : index
    %c0_21 = arith.constant 0 : index
    %51 = vector.load %arg6[%c0_20, %c0_21] : memref<512x128xf32, #tpu.memory_space<vmem>>, vector<512x128xf32>
    %cst_22 = arith.constant dense<0.000000e+00> : vector<16x128xf32>
    %52 = tpu.matmul %50, %51, %cst_22 {dimension_numbers = #tpu.dot_dimension_numbers<[1], [0], [0], [1], [0, 0, 1, 1], [], []>} : vector<16x512xf32>, vector<512x128xf32>, vector<16x128xf32> -> vector<16x128xf32>
    %cst_23 = arith.constant 0.000000e+00 : f32
    %53 = vector.broadcast %cst_23 : f32 to vector<8x128xf32>
    %cst_24 = arith.constant 0.000000e+00 : f32
    %54 = vector.broadcast %cst_24 : f32 to vector<8x128xf32>
    %55 = tpu.concatenate %53, %40, %54, %52, %54 in 0 : vector<8x128xf32>, vector<16x128xf32>, vector<8x128xf32>, vector<16x128xf32>, vector<8x128xf32> -> vector<56x128xf32>
    %cst_25 = arith.constant 0.000000e+00 : f32
    %56 = vector.broadcast %cst_25 : f32 to vector<16x128xf32>
    %c3_i32 = arith.constant 3 : i32
    %57 = tpu.dynamic_rotate %55 by %c3_i32 dim 1 : vector<56x128xf32>, i32 -> vector<56x128xf32>
    %c0_26 = arith.constant 0 : index
    %c0_27 = arith.constant 0 : index
    %c0_28 = arith.constant 0 : index
    %58 = vector.load %arg7[%c0_26, %c0_27, %c0_28] : memref<7x16x56xf32, #tpu.memory_space<vmem>>, vector<1x16x56xf32>
    %59 = vector.shape_cast %58 : vector<1x16x56xf32> to vector<16x56xf32>
    %cst_29 = arith.constant dense<0.000000e+00> : vector<16x128xf32>
    %60 = tpu.matmul %59, %57, %cst_29 {dimension_numbers = #tpu.dot_dimension_numbers<[1], [0], [0], [1], [0, 0, 1, 1], [], []>} : vector<16x56xf32>, vector<56x128xf32>, vector<16x128xf32> -> vector<16x128xf32>
    %61 = arith.addf %56, %60 : vector<16x128xf32>
    %c2_i32 = arith.constant 2 : i32
    %62 = tpu.dynamic_rotate %55 by %c2_i32 dim 1 : vector<56x128xf32>, i32 -> vector<56x128xf32>
    %c1 = arith.constant 1 : index
    %c0_30 = arith.constant 0 : index
    %c0_31 = arith.constant 0 : index
    %63 = vector.load %arg7[%c1, %c0_30, %c0_31] : memref<7x16x56xf32, #tpu.memory_space<vmem>>, vector<1x16x56xf32>
    %64 = vector.shape_cast %63 : vector<1x16x56xf32> to vector<16x56xf32>
    %cst_32 = arith.constant dense<0.000000e+00> : vector<16x128xf32>
    %65 = tpu.matmul %64, %62, %cst_32 {dimension_numbers = #tpu.dot_dimension_numbers<[1], [0], [0], [1], [0, 0, 1, 1], [], []>} : vector<16x56xf32>, vector<56x128xf32>, vector<16x128xf32> -> vector<16x128xf32>
    %66 = arith.addf %61, %65 : vector<16x128xf32>
    %c1_i32 = arith.constant 1 : i32
    %67 = tpu.dynamic_rotate %55 by %c1_i32 dim 1 : vector<56x128xf32>, i32 -> vector<56x128xf32>
    %c2 = arith.constant 2 : index
    %c0_33 = arith.constant 0 : index
    %c0_34 = arith.constant 0 : index
    %68 = vector.load %arg7[%c2, %c0_33, %c0_34] : memref<7x16x56xf32, #tpu.memory_space<vmem>>, vector<1x16x56xf32>
    %69 = vector.shape_cast %68 : vector<1x16x56xf32> to vector<16x56xf32>
    %cst_35 = arith.constant dense<0.000000e+00> : vector<16x128xf32>
    %70 = tpu.matmul %69, %67, %cst_35 {dimension_numbers = #tpu.dot_dimension_numbers<[1], [0], [0], [1], [0, 0, 1, 1], [], []>} : vector<16x56xf32>, vector<56x128xf32>, vector<16x128xf32> -> vector<16x128xf32>
    %71 = arith.addf %66, %70 : vector<16x128xf32>
    %c3 = arith.constant 3 : index
    %c0_36 = arith.constant 0 : index
    %c0_37 = arith.constant 0 : index
    %72 = vector.load %arg7[%c3, %c0_36, %c0_37] : memref<7x16x56xf32, #tpu.memory_space<vmem>>, vector<1x16x56xf32>
    %73 = vector.shape_cast %72 : vector<1x16x56xf32> to vector<16x56xf32>
    %cst_38 = arith.constant dense<0.000000e+00> : vector<16x128xf32>
    %74 = tpu.matmul %73, %55, %cst_38 {dimension_numbers = #tpu.dot_dimension_numbers<[1], [0], [0], [1], [0, 0, 1, 1], [], []>} : vector<16x56xf32>, vector<56x128xf32>, vector<16x128xf32> -> vector<16x128xf32>
    %75 = arith.addf %71, %74 : vector<16x128xf32>
    %c127_i32 = arith.constant 127 : i32
    %76 = tpu.dynamic_rotate %55 by %c127_i32 dim 1 : vector<56x128xf32>, i32 -> vector<56x128xf32>
    %c4 = arith.constant 4 : index
    %c0_39 = arith.constant 0 : index
    %c0_40 = arith.constant 0 : index
    %77 = vector.load %arg7[%c4, %c0_39, %c0_40] : memref<7x16x56xf32, #tpu.memory_space<vmem>>, vector<1x16x56xf32>
    %78 = vector.shape_cast %77 : vector<1x16x56xf32> to vector<16x56xf32>
    %cst_41 = arith.constant dense<0.000000e+00> : vector<16x128xf32>
    %79 = tpu.matmul %78, %76, %cst_41 {dimension_numbers = #tpu.dot_dimension_numbers<[1], [0], [0], [1], [0, 0, 1, 1], [], []>} : vector<16x56xf32>, vector<56x128xf32>, vector<16x128xf32> -> vector<16x128xf32>
    %80 = arith.addf %75, %79 : vector<16x128xf32>
    %c126_i32 = arith.constant 126 : i32
    %81 = tpu.dynamic_rotate %55 by %c126_i32 dim 1 : vector<56x128xf32>, i32 -> vector<56x128xf32>
    %c5 = arith.constant 5 : index
    %c0_42 = arith.constant 0 : index
    %c0_43 = arith.constant 0 : index
    %82 = vector.load %arg7[%c5, %c0_42, %c0_43] : memref<7x16x56xf32, #tpu.memory_space<vmem>>, vector<1x16x56xf32>
    %83 = vector.shape_cast %82 : vector<1x16x56xf32> to vector<16x56xf32>
    %cst_44 = arith.constant dense<0.000000e+00> : vector<16x128xf32>
    %84 = tpu.matmul %83, %81, %cst_44 {dimension_numbers = #tpu.dot_dimension_numbers<[1], [0], [0], [1], [0, 0, 1, 1], [], []>} : vector<16x56xf32>, vector<56x128xf32>, vector<16x128xf32> -> vector<16x128xf32>
    %85 = arith.addf %80, %84 : vector<16x128xf32>
    %c125_i32 = arith.constant 125 : i32
    %86 = tpu.dynamic_rotate %55 by %c125_i32 dim 1 : vector<56x128xf32>, i32 -> vector<56x128xf32>
    %c6 = arith.constant 6 : index
    %c0_45 = arith.constant 0 : index
    %c0_46 = arith.constant 0 : index
    %87 = vector.load %arg7[%c6, %c0_45, %c0_46] : memref<7x16x56xf32, #tpu.memory_space<vmem>>, vector<1x16x56xf32>
    %88 = vector.shape_cast %87 : vector<1x16x56xf32> to vector<16x56xf32>
    %cst_47 = arith.constant dense<0.000000e+00> : vector<16x128xf32>
    %89 = tpu.matmul %88, %86, %cst_47 {dimension_numbers = #tpu.dot_dimension_numbers<[1], [0], [0], [1], [0, 0, 1, 1], [], []>} : vector<16x56xf32>, vector<56x128xf32>, vector<16x128xf32> -> vector<16x128xf32>
    %90 = arith.addf %85, %89 : vector<16x128xf32>
    %91 = arith.negf %90 : vector<16x128xf32>
    %92 = math.exp %91 : vector<16x128xf32>
    %cst_48 = arith.constant 1.000000e+00 : f32
    %93 = vector.broadcast %cst_48 : f32 to vector<16x128xf32>
    %94 = arith.addf %93, %92 : vector<16x128xf32>
    %95 = arith.divf %93, %94 : vector<16x128xf32>
    %cst_49 = arith.constant dense<0.000000e+00> : vector<16x512xf32>
    %96 = tpu.matmul %95, %3, %cst_49 {dimension_numbers = #tpu.dot_dimension_numbers<[1], [1], [0], [0], [0, 0, 1, 0], [], []>} : vector<16x128xf32>, vector<512x128xf32>, vector<16x512xf32> -> vector<16x512xf32>
    %cst_50 = arith.constant 1.000000e+00 : f32
    %97 = vector.broadcast %cst_50 : f32 to vector<16x512xf32>
    %98 = arith.addf %97, %96 : vector<16x512xf32>
    %99 = arith.mulf %37, %98 : vector<16x512xf32>
    %c0_51 = arith.constant 0 : index
    %c0_52 = arith.constant 0 : index
    %c0_53 = arith.constant 0 : index
    %100 = vector.load %arg8[%c0_51, %c0_52, %c0_53] : memref<1x16x512xf32, #tpu.memory_space<vmem>>, vector<1x16x512xf32>
    %101 = vector.shape_cast %100 : vector<1x16x512xf32> to vector<16x512xf32>
    %102 = vector.shape_cast %99 : vector<16x512xf32> to vector<1x16x512xf32>
    tpu.vector_store %arg8[%c0_51, %c0_52, %c0_53], %102 {strides = array<i32>} : memref<1x16x512xf32, #tpu.memory_space<vmem>>, vector<1x16x512xf32>,
    return
  }
  func.func @transform_0(%arg0: i32) -> (i32, i32, i32) {
    %c0_i32 = arith.constant 0 : i32
    %c0_i32_0 = arith.constant 0 : i32
    %c0_i32_1 = arith.constant 0 : i32
    return %arg0, %c0_i32, %c0_i32_0 : i32, i32, i32
  }
  func.func @transform_1(%arg0: i32) -> (i32, i32) {
    %c0_i32 = arith.constant 0 : i32
    %c0_i32_0 = arith.constant 0 : i32
    %c0_i32_1 = arith.constant 0 : i32
    return %c0_i32, %c0_i32_0 : i32, i32
  }
  func.func @transform_2(%arg0: i32) -> (i32, i32) {
    %c0_i32 = arith.constant 0 : i32
    %c0_i32_0 = arith.constant 0 : i32
    %c0_i32_1 = arith.constant 0 : i32
    return %c0_i32, %c0_i32_0 : i32, i32
  }
  func.func @transform_3(%arg0: i32) -> (i32, i32) {
    %c0_i32 = arith.constant 0 : i32
    %c0_i32_0 = arith.constant 0 : i32
    %c0_i32_1 = arith.constant 0 : i32
    return %c0_i32, %c0_i32_0 : i32, i32
  }
  func.func @transform_4(%arg0: i32) -> (i32, i32) {
    %c0_i32 = arith.constant 0 : i32
    %c0_i32_0 = arith.constant 0 : i32
    %c0_i32_1 = arith.constant 0 : i32
    return %c0_i32, %c0_i32_0 : i32, i32
  }
  func.func @transform_5(%arg0: i32) -> (i32, i32) {
    %c0_i32 = arith.constant 0 : i32
    %c0_i32_0 = arith.constant 0 : i32
    %c0_i32_1 = arith.constant 0 : i32
    return %c0_i32, %c0_i32_0 : i32, i32
  }
  func.func @transform_6(%arg0: i32) -> (i32, i32, i32) {
    %c0_i32 = arith.constant 0 : i32
    %c0_i32_0 = arith.constant 0 : i32
    %c0_i32_1 = arith.constant 0 : i32
    %c0_i32_2 = arith.constant 0 : i32
    return %c0_i32, %c0_i32_0, %c0_i32_1 : i32, i32, i32
  }
  func.func @transform_7(%arg0: i32) -> (i32, i32, i32) {
    %c0_i32 = arith.constant 0 : i32
    %c0_i32_0 = arith.constant 0 : i32
    %c0_i32_1 = arith.constant 0 : i32
    return %arg0, %c0_i32, %c0_i32_0 : i32, i32, i32
  }
}

</mosaic_0001>

<llo_original>
// kernel: cbam_pallas.1
$region0: #{cbam_pallas.1}
  #allocation0 [shape = 'u32[]', space=smem, size = 0x4, offset = 0x4, fixed_abs, tag = 'smem constant byte address 0x4 - core index']
  #allocation1 [shape = 'u32[144,128]{1,0:T(1,128)}', space=vmem, size = 0x12000, scoped, tag = 'internal scratch']
  %s0 = inlined_call_operand.vmem [shape: f32[2,16,512], index: 0, kind: input, shape index: {}]
  %s1 = inlined_call_operand.vmem [shape: f32[32,4], index: 1, kind: input, shape index: {}]
  %s2 = inlined_call_operand.vmem [shape: f32[4,32], index: 2, kind: input, shape index: {}]
  %s3 = inlined_call_operand.hbm [shape: f32[512,32], index: 3, kind: input, shape index: {}]
  %s4 = inlined_call_operand.hbm [shape: f32[512,128], index: 4, kind: input, shape index: {}]
  %s5 = inlined_call_operand.vmem [shape: f32[512,128], index: 5, kind: input, shape index: {}]
  %s6 = inlined_call_operand.vmem [shape: f32[7,16,56], index: 6, kind: input, shape index: {}]
  %s7 = inlined_call_operand.vmem [shape: f32[2,16,512], index: 7, kind: output, shape index: {}]
  %s8 = sld [smem:[#allocation0]]
  $region69: #{cbam_pallas.1} parent=0
    _
  %s10 = ssub.s32 1, %s8
  %s11 = scalar_select 0, %s10, %s8
  $region1: #{cbam_pallas.1} parent=0
    #allocation2 [shape = 'u8[262144]{0}', space=vmem, size = 0x40000, scoped, tag = 'input window, operand 3, single buffered']
    #allocation3 [shape = 's32[2]{0}', space=sflag, size = 0x8, scoped, tag = 'scoped memory for cbam_pallas.1']
    #allocation4 [shape = 'u8[262144]{0}', space=vmem, size = 0x40000, scoped, tag = 'input window, operand 4, single buffered']
    #allocation5 [shape = 's32[1]{0}', space=sflag, size = 0x4, scoped, tag = 'scoped memory for cbam_pallas.1']
    %12 = vsyncpa [#allocation3], 0
    %13 = vsyncpa [#allocation5], 0
    loop: start=0, step=1, limit=4
    $region2: #{cbam_pallas.1} parent=1 // loop_pre_header
      _
    $region3: #{cbam_pallas.1} parent=1 // loop_header
      %s15 = sphi 0, %s19
      %p16 = scmp.ge.s32.totalorder %s15, 4
      %s25 = sphi 0, %s27
      %s28 = sphi 0, %s25
      %s29 = sphi 0, %s28
      %s45 = sphi 0, %s29
      %s49 = sphi 0, %s49
      %s51 = sphi 0, %s49
      %s52 = sphi 0, %s51
      %s66 = sphi 0, %s52
      %s70 = sphi 0, %s70
      %s72 = sphi 0, %s70
      %s73 = sphi 0, %s72
      %s87 = sphi 0, %s73
      %s91 = sphi 0, %s91
      %s93 = sphi 0, %s91
      %s94 = sphi 0, %s93
      %s108 = sphi 0, %s94
      %s112 = sphi 0, %s112
      %s114 = sphi 0, %s112
      %s115 = sphi 0, %s114
      %s129 = sphi 0, %s115
      %s133 = sphi 0, %s133
      %s135 = sphi 0, %s133
      %s136 = sphi 0, %s135
      %s150 = sphi 0, %s136
      %s154 = sphi 0, %s154
      %s156 = sphi 0, %s154
      %s157 = sphi 0, %s156
      %s171 = sphi 0, %s157
      %s177 = sphi 0, %s179
      %s180 = sphi 0, %s177
      %s181 = sphi 0, %s180
      %s197 = sphi 0, %s181
    $region4: #{cbam_pallas.1} parent=1 // loop_header_branch
      %18 = sbr.rel (%p16) target = $region8
    $region5: #{cbam_pallas.1} parent=1 // loop_body
      %s20 = ssub.s32 %s15, 1
      %s21 = ssub.s32 %s15, 2
      %s22 = sadd.s32 %s15, 1
      %s23 = ssub.s32 %s15, %s22
      %p24 = scmp.eq.s32.totalorder %s23, 0
      %s26 = sadd.s32 %s25, 1
      %s27 = scalar_select %p24, %s25, %s26
      %p30 = pneg %p24
      %p31 = scmp.eq.s32.totalorder %s15, 1
      %p32 = por %p30, %p31
      %p33 = scmp.ne.s32.totalorder %s25, %s28
      %p34 = scmp.eq.s32.totalorder %s15, 0
      %p35 = por %p33, %p34
      %p36 = scmp.ne.s32.totalorder %s25, %s28
      %p37 = scmp.eq.s32.totalorder %s20, 1
      %p38 = por %p36, %p37
      %p39 = scmp.ne.s32.totalorder %s28, %s29
      %p40 = scmp.eq.s32.totalorder %s20, 0
      %p41 = por %p39, %p40
      %p42 = scmp.ne.s32.totalorder %s28, %s29
      %p43 = scmp.eq.s32.totalorder %s21, 1
      %p44 = por %p42, %p43
      %p46 = scmp.ne.s32.totalorder %s29, %s45
      %p47 = scmp.eq.s32.totalorder %s21, 0
      %p48 = por %p46, %p47
      %s50 = sadd.s32 %s49, 1
      %p53 = scmp.eq.s32.totalorder %s15, 1
      %p54 = scmp.ne.s32.totalorder %s49, %s51
      %p55 = scmp.eq.s32.totalorder %s15, 0
      %p56 = por %p54, %p55
      %p57 = scmp.ne.s32.totalorder %s49, %s51
      %p58 = scmp.eq.s32.totalorder %s20, 1
      %p59 = por %p57, %p58
      %p60 = scmp.ne.s32.totalorder %s51, %s52
      %p61 = scmp.eq.s32.totalorder %s20, 0
      %p62 = por %p60, %p61
      %p63 = scmp.ne.s32.totalorder %s51, %s52
      %p64 = scmp.eq.s32.totalorder %s21, 1
      %p65 = por %p63, %p64
      %p67 = scmp.ne.s32.totalorder %s52, %s66
      %p68 = scmp.eq.s32.totalorder %s21, 0
      %p69 = por %p67, %p68
      %s71 = sadd.s32 %s70, 1
      %p74 = scmp.eq.s32.totalorder %s15, 1
      %p75 = scmp.ne.s32.totalorder %s70, %s72
      %p76 = scmp.eq.s32.totalorder %s15, 0
      %p77 = por %p75, %p76
      %p78 = scmp.ne.s32.totalorder %s70, %s72
      %p79 = scmp.eq.s32.totalorder %s20, 1
      %p80 = por %p78, %p79
      %p81 = scmp.ne.s32.totalorder %s72, %s73
      %p82 = scmp.eq.s32.totalorder %s20, 0
      %p83 = por %p81, %p82
      %p84 = scmp.ne.s32.totalorder %s72, %s73
      %p85 = scmp.eq.s32.totalorder %s21, 1
      %p86 = por %p84, %p85
      %p88 = scmp.ne.s32.totalorder %s73, %s87
      %p89 = scmp.eq.s32.totalorder %s21, 0
      %p90 = por %p88, %p89
      %s92 = sadd.s32 %s91, 1
      %p95 = scmp.eq.s32.totalorder %s15, 1
      %p96 = scmp.ne.s32.totalorder %s91, %s93
      %p97 = scmp.eq.s32.totalorder %s15, 0
      %p98 = por %p96, %p97
      %p99 = scmp.ne.s32.totalorder %s91, %s93
      %p100 = scmp.eq.s32.totalorder %s20, 1
      %p101 = por %p99, %p100
      %p102 = scmp.ne.s32.totalorder %s93, %s94
      %p103 = scmp.eq.s32.totalorder %s20, 0
      %p104 = por %p102, %p103
      %p105 = scmp.ne.s32.totalorder %s93, %s94
      %p106 = scmp.eq.s32.totalorder %s21, 1
      %p107 = por %p105, %p106
      %p109 = scmp.ne.s32.totalorder %s94, %s108
      %p110 = scmp.eq.s32.totalorder %s21, 0
      %p111 = por %p109, %p110
      %s113 = sadd.s32 %s112, 1
      %p116 = scmp.eq.s32.totalorder %s15, 1
      %p117 = scmp.ne.s32.totalorder %s112, %s114
      %p118 = scmp.eq.s32.totalorder %s15, 0
      %p119 = por %p117, %p118
      %p120 = scmp.ne.s32.totalorder %s112, %s114
      %p121 = scmp.eq.s32.totalorder %s20, 1
      %p122 = por %p120, %p121
      %p123 = scmp.ne.s32.totalorder %s114, %s115
      %p124 = scmp.eq.s32.totalorder %s20, 0
      %p125 = por %p123, %p124
      %p126 = scmp.ne.s32.totalorder %s114, %s115
      %p127 = scmp.eq.s32.totalorder %s21, 1
      %p128 = por %p126, %p127
      %p130 = scmp.ne.s32.totalorder %s115, %s129
      %p131 = scmp.eq.s32.totalorder %s21, 0
      %p132 = por %p130, %p131
      %s134 = sadd.s32 %s133, 1
      %p137 = scmp.eq.s32.totalorder %s15, 1
      %p138 = scmp.ne.s32.totalorder %s133, %s135
      %p139 = scmp.eq.s32.totalorder %s15, 0
      %p140 = por %p138, %p139
      %p141 = scmp.ne.s32.totalorder %s133, %s135
      %p142 = scmp.eq.s32.totalorder %s20, 1
      %p143 = por %p141, %p142
      %p144 = scmp.ne.s32.totalorder %s135, %s136
      %p145 = scmp.eq.s32.totalorder %s20, 0
      %p146 = por %p144, %p145
      %p147 = scmp.ne.s32.totalorder %s135, %s136
      %p148 = scmp.eq.s32.totalorder %s21, 1
      %p149 = por %p147, %p148
      %p151 = scmp.ne.s32.totalorder %s136, %s150
      %p152 = scmp.eq.s32.totalorder %s21, 0
      %p153 = por %p151, %p152
      %s155 = sadd.s32 %s154, 1
      %p158 = scmp.eq.s32.totalorder %s15, 1
      %p159 = scmp.ne.s32.totalorder %s154, %s156
      %p160 = scmp.eq.s32.totalorder %s15, 0
      %p161 = por %p159, %p160
      %p162 = scmp.ne.s32.totalorder %s154, %s156
      %p163 = scmp.eq.s32.totalorder %s20, 1
      %p164 = por %p162, %p163
      %p165 = scmp.ne.s32.totalorder %s156, %s157
      %p166 = scmp.eq.s32.totalorder %s20, 0
      %p167 = por %p165, %p166
      %p168 = scmp.ne.s32.totalorder %s156, %s157
      %p169 = scmp.eq.s32.totalorder %s21, 1
      %p170 = por %p168, %p169
      %p172 = scmp.ne.s32.totalorder %s157, %s171
      %p173 = scmp.eq.s32.totalorder %s21, 0
      %p174 = por %p172, %p173
      %s175 = ssub.s32 %s15, %s22
      %p176 = scmp.eq.s32.totalorder %s175, 0
      %s178 = sadd.s32 %s177, 1
      %s179 = scalar_select %p176, %s177, %s178
      %p182 = pneg %p176
      %p183 = scmp.eq.s32.totalorder %s15, 1
      %p184 = por %p182, %p183
      %p185 = scmp.ne.s32.totalorder %s177, %s180
      %p186 = scmp.eq.s32.totalorder %s15, 0
      %p187 = por %p185, %p186
      %p188 = scmp.ne.s32.totalorder %s177, %s180
      %p189 = scmp.eq.s32.totalorder %s20, 1
      %p190 = por %p188, %p189
      %p191 = scmp.ne.s32.totalorder %s180, %s181
      %p192 = scmp.eq.s32.totalorder %s20, 0
      %p193 = por %p191, %p192
      %p194 = scmp.ne.s32.totalorder %s180, %s181
      %p195 = scmp.eq.s32.totalorder %s21, 1
      %p196 = por %p194, %p195
      %p198 = scmp.ne.s32.totalorder %s181, %s197
      %p199 = scmp.eq.s32.totalorder %s21, 0
      %p200 = por %p198, %p199
      %p201 = scmp.le.s32.totalorder 1, %s15
      %p202 = scmp.lt.s32.totalorder %s15, 3
      %p203 = pnand %p201, %p202
      %p204 = pneg %p203
      // Predicated region
      $region9: #{cbam_pallas.1} parent=5 // pred_check
        _
      $region10: #{cbam_pallas.1} parent=5 // pred_check_branch
        %206 = sbr.rel (%p203) target = $region12
      $region11: #{cbam_pallas.1} parent=5 // pred_region
        %s207 = ssub.s32 %s15, 1
        // Predicated region
        $region13: #{cbam_pallas.1} parent=11 // pred_check
          %p208 = pneg %p62
        $region14: #{cbam_pallas.1} parent=11 // pred_check_branch
          %210 = sbr.rel (%p208) target = $region16
        $region15: #{cbam_pallas.1} parent=11 // pred_region
          _
        $region16: #{cbam_pallas.1} parent=11 // pred_fallthru
          _
        // Predicated region
        $region17: #{cbam_pallas.1} parent=11 // pred_check
          %p211 = pneg %p83
        $region18: #{cbam_pallas.1} parent=11 // pred_check_branch
          %213 = sbr.rel (%p211) target = $region20
        $region19: #{cbam_pallas.1} parent=11 // pred_region
          _
        $region20: #{cbam_pallas.1} parent=11 // pred_fallthru
          _
        // Predicated region
        $region21: #{cbam_pallas.1} parent=11 // pred_check
          %p214 = pneg %p104
        $region22: #{cbam_pallas.1} parent=11 // pred_check_branch
          %216 = sbr.rel (%p214) target = $region24
        $region23: #{cbam_pallas.1} parent=11 // pred_region
          %s218 = ssub.s32 8192, 8192
          %219 = vsyncadd [#allocation3], %s218
          %s220 = sshll.u32 [#allocation2], 4
          %s221 = int_to_ptr.vmem [resolvable:$true] %s220
          %226 = dma.hbm_to_vmem [thread:$0]  %s3, 8192, %s221, [#allocation3], 128, 128, 8
        $region24: #{cbam_pallas.1} parent=11 // pred_fallthru
          _
        // Predicated region
        $region25: #{cbam_pallas.1} parent=11 // pred_check
          %p227 = pneg %p125
        $region26: #{cbam_pallas.1} parent=11 // pred_check_branch
          %229 = sbr.rel (%p227) target = $region28
        $region27: #{cbam_pallas.1} parent=11 // pred_region
          %s231 = ssub.s32 8192, 8192
          %232 = vsyncadd [#allocation5], %s231
          %s233 = sshll.u32 [#allocation4], 4
          %s234 = int_to_ptr.vmem [resolvable:$true] %s233
          %239 = dma.hbm_to_vmem [thread:$0]  %s4, 8192, %s234, [#allocation5], 128, 128, 8
        $region28: #{cbam_pallas.1} parent=11 // pred_fallthru
          _
        // Predicated region
        $region29: #{cbam_pallas.1} parent=11 // pred_check
          %p240 = pneg %p146
        $region30: #{cbam_pallas.1} parent=11 // pred_check_branch
          %242 = sbr.rel (%p240) target = $region32
        $region31: #{cbam_pallas.1} parent=11 // pred_region
          _
        $region32: #{cbam_pallas.1} parent=11 // pred_fallthru
          _
        // Predicated region
        $region33: #{cbam_pallas.1} parent=11 // pred_check
          %p243 = pneg %p167
        $region34: #{cbam_pallas.1} parent=11 // pred_check_branch
          %245 = sbr.rel (%p243) target = $region36
        $region35: #{cbam_pallas.1} parent=11 // pred_region
          _
        $region36: #{cbam_pallas.1} parent=11 // pred_fallthru
          _
      $region12: #{cbam_pallas.1} parent=5 // pred_fallthru
        _
      %p246 = scmp.lt.s32.totalorder %s15, 2
      // Predicated region
      $region37: #{cbam_pallas.1} parent=5 // pred_check
        %p247 = pneg %p246
      $region38: #{cbam_pallas.1} parent=5 // pred_check_branch
        %249 = sbr.rel (%p247) target = $region40
      $region39: #{cbam_pallas.1} parent=5 // pred_region
        // Predicated region
        $region41: #{cbam_pallas.1} parent=39 // pred_check
          %p250 = pneg %p35
        $region42: #{cbam_pallas.1} parent=39 // pred_check_branch
          %252 = sbr.rel (%p250) target = $region44
        $region43: #{cbam_pallas.1} parent=39 // pred_region
          %p253 = scmp.lt.s32.totalorder %s15, 1
          %s254 = scalar_select %p253, %s15, 1
          %s255 = smul.addr %s254, 8
          %s256 = smul.addr %s255, 8
          %s257 = scalar_lea.vmem %s0, %s256
        $region44: #{cbam_pallas.1} parent=39 // pred_fallthru
          _
      $region40: #{cbam_pallas.1} parent=5 // pred_fallthru
        _
      %p258 = scmp.le.s32.totalorder 1, %s15
      %p259 = scmp.lt.s32.totalorder %s15, 3
      %p260 = pnand %p258, %p259
      %p261 = pneg %p260
      // Predicated region
      $region45: #{cbam_pallas.1} parent=5 // pred_check
        _
      $region46: #{cbam_pallas.1} parent=5 // pred_check_branch
        %263 = sbr.rel (%p260) target = $region48
      $region47: #{cbam_pallas.1} parent=5 // pred_region
        %s264 = ssub.s32 %s15, 1
        // Predicated region
        $region49: #{cbam_pallas.1} parent=47 // pred_check
          %p265 = pneg %p104
        $region50: #{cbam_pallas.1} parent=47 // pred_check_branch
          %267 = sbr.rel (%p265) target = $region52
        $region51: #{cbam_pallas.1} parent=47 // pred_region
          %268 = dma.done [#allocation3], 8192
        $region52: #{cbam_pallas.1} parent=47 // pred_fallthru
          _
        // Predicated region
        $region53: #{cbam_pallas.1} parent=47 // pred_check
          %p269 = pneg %p125
        $region54: #{cbam_pallas.1} parent=47 // pred_check_branch
          %271 = sbr.rel (%p269) target = $region56
        $region55: #{cbam_pallas.1} parent=47 // pred_region
          %272 = dma.done [#allocation5], 8192
        $region56: #{cbam_pallas.1} parent=47 // pred_fallthru
          _
        %p273 = scmp.lt.s32.totalorder %s20, 1
        %s274 = scalar_select %p273, %s20, 1
        %s275 = smul.addr %s274, 8
        %s276 = smul.addr %s275, 8
        %s277 = scalar_lea.vmem %s0, %s276
        %p278 = pneg %p41
        %p279 = pneg %p38
        %p280 = pneg %p62
        %p281 = pneg %p59
        %p282 = pneg %p83
        %p283 = pneg %p80
        %p284 = pneg %p104
        %p285 = pneg %p101
        %p286 = pneg %p125
        %p287 = pneg %p122
        %p288 = pneg %p146
        %p289 = pneg %p143
        %p290 = pneg %p167
        %p291 = pneg %p164
        %p292 = pneg %p193
        %p293 = pneg %p190
        %p294 = scmp.lt.s32.totalorder %s20, 1
        %s295 = scalar_select %p294, %s20, 1
        %s296 = smul.addr %s295, 8
        %s297 = smul.addr %s296, 8
        %s298 = scalar_lea.vmem %s7, %s297
        %p299 = scmp.lt.s32.totalorder %s20, 1
        %s300 = scalar_select %p299, %s20, 1
        %s301 = smul.addr %s300, 8
        %s302 = smul.addr %s301, 8
        %s303 = scalar_lea.vmem %s0, %s302
        %p304 = scmp.lt.s32.totalorder %s20, 1
        %s305 = scalar_select %p304, %s20, 1
        %s306 = smul.addr %s305, 8
        %s307 = smul.addr %s306, 8
        %s308 = scalar_lea.vmem %s7, %s307
        %v309 = vld [vmem:[%s303] sm:$0xff]
        %v310 = vld [vmem:[%s303 + $0x8] sm:$0xff]
        %v311 = vld [vmem:[%s303 + $0x10] sm:$0xff]
        %v312 = vld [vmem:[%s303 + $0x18] sm:$0xff]
        %v313 = vld [vmem:[%s303 + $0x20] sm:$0xff]
        %v314 = vld [vmem:[%s303 + $0x28] sm:$0xff]
        %v315 = vld [vmem:[%s303 + $0x30] sm:$0xff]
        %v316 = vld [vmem:[%s303 + $0x38] sm:$0xff]
        %v317 = vld [vmem:[#allocation2] sm:$0xff]
        %v318 = vld [vmem:[#allocation2 + $0x8] sm:$0xff]
        %v319 = vld [vmem:[#allocation2 + $0x10] sm:$0xff]
        %v320 = vld [vmem:[#allocation2 + $0x18] sm:$0xff]
        %v321 = vld [vmem:[#allocation2 + $0x20] sm:$0xff]
        %v322 = vld [vmem:[#allocation2 + $0x28] sm:$0xff]
        %v323 = vld [vmem:[#allocation2 + $0x30] sm:$0xff]
        %v324 = vld [vmem:[#allocation2 + $0x38] sm:$0xff]
        %v325 = vld [vmem:[#allocation2 + $0x40] sm:$0xff]
        %v326 = vld [vmem:[#allocation2 + $0x48] sm:$0xff]
        %v327 = vld [vmem:[#allocation2 + $0x50] sm:$0xff]
        %v328 = vld [vmem:[#allocation2 + $0x58] sm:$0xff]
        %v329 = vld [vmem:[#allocation2 + $0x60] sm:$0xff]
        %v330 = vld [vmem:[#allocation2 + $0x68] sm:$0xff]
        %v331 = vld [vmem:[#allocation2 + $0x70] sm:$0xff]
        %v332 = vld [vmem:[#allocation2 + $0x78] sm:$0xff]
        %v333 = vld [vmem:[#allocation2 + $0x80] sm:$0xff]
        %v334 = vld [vmem:[#allocation2 + $0x88] sm:$0xff]
        %v335 = vld [vmem:[#allocation2 + $0x90] sm:$0xff]
        %v336 = vld [vmem:[#allocation2 + $0x98] sm:$0xff]
        %v337 = vld [vmem:[#allocation2 + $0xa0] sm:$0xff]
        %v338 = vld [vmem:[#allocation2 + $0xa8] sm:$0xff]
        %v339 = vld [vmem:[#allocation2 + $0xb0] sm:$0xff]
        %v340 = vld [vmem:[#allocation2 + $0xb8] sm:$0xff]
        %v341 = vld [vmem:[#allocation2 + $0xc0] sm:$0xff]
        %v342 = vld [vmem:[#allocation2 + $0xc8] sm:$0xff]
        %v343 = vld [vmem:[#allocation2 + $0xd0] sm:$0xff]
        %v344 = vld [vmem:[#allocation2 + $0xd8] sm:$0xff]
        %v345 = vld [vmem:[#allocation2 + $0xe0] sm:$0xff]
        %v346 = vld [vmem:[#allocation2 + $0xe8] sm:$0xff]
        %v347 = vld [vmem:[#allocation2 + $0xf0] sm:$0xff]
        %v348 = vld [vmem:[#allocation2 + $0xf8] sm:$0xff]
        %v349 = vld [vmem:[#allocation2 + $0x100] sm:$0xff]
        %v350 = vld [vmem:[#allocation2 + $0x108] sm:$0xff]
        %v351 = vld [vmem:[#allocation2 + $0x110] sm:$0xff]
        %v352 = vld [vmem:[#allocation2 + $0x118] sm:$0xff]
        %v353 = vld [vmem:[#allocation2 + $0x120] sm:$0xff]
        %v354 = vld [vmem:[#allocation2 + $0x128] sm:$0xff]
        %v355 = vld [vmem:[#allocation2 + $0x130] sm:$0xff]
        %v356 = vld [vmem:[#allocation2 + $0x138] sm:$0xff]
        %v357 = vld [vmem:[#allocation2 + $0x140] sm:$0xff]
        %v358 = vld [vmem:[#allocation2 + $0x148] sm:$0xff]
        %v359 = vld [vmem:[#allocation2 + $0x150] sm:$0xff]
        %v360 = vld [vmem:[#allocation2 + $0x158] sm:$0xff]
        %v361 = vld [vmem:[#allocation2 + $0x160] sm:$0xff]
        %v362 = vld [vmem:[#allocation2 + $0x168] sm:$0xff]
        %v363 = vld [vmem:[#allocation2 + $0x170] sm:$0xff]
        %v364 = vld [vmem:[#allocation2 + $0x178] sm:$0xff]
        %v365 = vld [vmem:[#allocation2 + $0x180] sm:$0xff]
        %v366 = vld [vmem:[#allocation2 + $0x188] sm:$0xff]
        %v367 = vld [vmem:[#allocation2 + $0x190] sm:$0xff]
        %v368 = vld [vmem:[#allocation2 + $0x198] sm:$0xff]
        %v369 = vld [vmem:[#allocation2 + $0x1a0] sm:$0xff]
        %v370 = vld [vmem:[#allocation2 + $0x1a8] sm:$0xff]
        %v371 = vld [vmem:[#allocation2 + $0x1b0] sm:$0xff]
        %v372 = vld [vmem:[#allocation2 + $0x1b8] sm:$0xff]
        %v373 = vld [vmem:[#allocation2 + $0x1c0] sm:$0xff]
        %v374 = vld [vmem:[#allocation2 + $0x1c8] sm:$0xff]
        %v375 = vld [vmem:[#allocation2 + $0x1d0] sm:$0xff]
        %v376 = vld [vmem:[#allocation2 + $0x1d8] sm:$0xff]
        %v377 = vld [vmem:[#allocation2 + $0x1e0] sm:$0xff]
        %v378 = vld [vmem:[#allocation2 + $0x1e8] sm:$0xff]
        %v379 = vld [vmem:[#allocation2 + $0x1f0] sm:$0xff]
        %v380 = vld [vmem:[#allocation2 + $0x1f8] sm:$0xff]
        %v381 = vld [vmem:[#allocation4] sm:$0xff]
        %v382 = vld [vmem:[#allocation4 + $0x8] sm:$0xff]
        %v383 = vld [vmem:[#allocation4 + $0x10] sm:$0xff]
        %v384 = vld [vmem:[#allocation4 + $0x18] sm:$0xff]
        %v385 = vld [vmem:[#allocation4 + $0x20] sm:$0xff]
        %v386 = vld [vmem:[#allocation4 + $0x28] sm:$0xff]
        %v387 = vld [vmem:[#allocation4 + $0x30] sm:$0xff]
        %v388 = vld [vmem:[#allocation4 + $0x38] sm:$0xff]
        %v389 = vld [vmem:[#allocation4 + $0x40] sm:$0xff]
        %v390 = vld [vmem:[#allocation4 + $0x48] sm:$0xff]
        %v391 = vld [vmem:[#allocation4 + $0x50] sm:$0xff]
        %v392 = vld [vmem:[#allocation4 + $0x58] sm:$0xff]
        %v393 = vld [vmem:[#allocation4 + $0x60] sm:$0xff]
        %v394 = vld [vmem:[#allocation4 + $0x68] sm:$0xff]
        %v395 = vld [vmem:[#allocation4 + $0x70] sm:$0xff]
        %v396 = vld [vmem:[#allocation4 + $0x78] sm:$0xff]
        %v397 = vld [vmem:[#allocation4 + $0x80] sm:$0xff]
        %v398 = vld [vmem:[#allocation4 + $0x88] sm:$0xff]
        %v399 = vld [vmem:[#allocation4 + $0x90] sm:$0xff]
        %v400 = vld [vmem:[#allocation4 + $0x98] sm:$0xff]
        %v401 = vld [vmem:[#allocation4 + $0xa0] sm:$0xff]
        %v402 = vld [vmem:[#allocation4 + $0xa8] sm:$0xff]
        %v403 = vld [vmem:[#allocation4 + $0xb0] sm:$0xff]
        %v404 = vld [vmem:[#allocation4 + $0xb8] sm:$0xff]
        %v405 = vld [vmem:[#allocation4 + $0xc0] sm:$0xff]
        %v406 = vld [vmem:[#allocation4 + $0xc8] sm:$0xff]
        %v407 = vld [vmem:[#allocation4 + $0xd0] sm:$0xff]
        %v408 = vld [vmem:[#allocation4 + $0xd8] sm:$0xff]
        %v409 = vld [vmem:[#allocation4 + $0xe0] sm:$0xff]
        %v410 = vld [vmem:[#allocation4 + $0xe8] sm:$0xff]
        %v411 = vld [vmem:[#allocation4 + $0xf0] sm:$0xff]
        %v412 = vld [vmem:[#allocation4 + $0xf8] sm:$0xff]
        %v413 = vld [vmem:[#allocation4 + $0x100] sm:$0xff]
        %v414 = vld [vmem:[#allocation4 + $0x108] sm:$0xff]
        %v415 = vld [vmem:[#allocation4 + $0x110] sm:$0xff]
        %v416 = vld [vmem:[#allocation4 + $0x118] sm:$0xff]
        %v417 = vld [vmem:[#allocation4 + $0x120] sm:$0xff]
        %v418 = vld [vmem:[#allocation4 + $0x128] sm:$0xff]
        %v419 = vld [vmem:[#allocation4 + $0x130] sm:$0xff]
        %v420 = vld [vmem:[#allocation4 + $0x138] sm:$0xff]
        %v421 = vld [vmem:[#allocation4 + $0x140] sm:$0xff]
        %v422 = vld [vmem:[#allocation4 + $0x148] sm:$0xff]
        %v423 = vld [vmem:[#allocation4 + $0x150] sm:$0xff]
        %v424 = vld [vmem:[#allocation4 + $0x158] sm:$0xff]
        %v425 = vld [vmem:[#allocation4 + $0x160] sm:$0xff]
        %v426 = vld [vmem:[#allocation4 + $0x168] sm:$0xff]
        %v427 = vld [vmem:[#allocation4 + $0x170] sm:$0xff]
        %v428 = vld [vmem:[#allocation4 + $0x178] sm:$0xff]
        %v429 = vld [vmem:[#allocation4 + $0x180] sm:$0xff]
        %v430 = vld [vmem:[#allocation4 + $0x188] sm:$0xff]
        %v431 = vld [vmem:[#allocation4 + $0x190] sm:$0xff]
        %v432 = vld [vmem:[#allocation4 + $0x198] sm:$0xff]
        %v433 = vld [vmem:[#allocation4 + $0x1a0] sm:$0xff]
        %v434 = vld [vmem:[#allocation4 + $0x1a8] sm:$0xff]
        %v435 = vld [vmem:[#allocation4 + $0x1b0] sm:$0xff]
        %v436 = vld [vmem:[#allocation4 + $0x1b8] sm:$0xff]
        %v437 = vld [vmem:[#allocation4 + $0x1c0] sm:$0xff]
        %v438 = vld [vmem:[#allocation4 + $0x1c8] sm:$0xff]
        %v439 = vld [vmem:[#allocation4 + $0x1d0] sm:$0xff]
        %v440 = vld [vmem:[#allocation4 + $0x1d8] sm:$0xff]
        %v441 = vld [vmem:[#allocation4 + $0x1e0] sm:$0xff]
        %v442 = vld [vmem:[#allocation4 + $0x1e8] sm:$0xff]
        %v443 = vld [vmem:[#allocation4 + $0x1f0] sm:$0xff]
        %v444 = vld [vmem:[#allocation4 + $0x1f8] sm:$0xff]
        %v445 = vadd.f32 %v309, %v313
        %v446 = vrot.slane %v445, 4
        %v447 = vadd.f32 %v445, %v446
        %v448 = vrot.slane %v447, 2
        %v449 = vadd.f32 %v447, %v448
        %v450 = vrot.slane %v449, 1
        %v451 = vadd.f32 %v449, %v450
        %v452 = vadd.f32 %v310, %v314
        %v453 = vrot.slane %v452, 4
        %v454 = vadd.f32 %v452, %v453
        %v455 = vrot.slane %v454, 2
        %v456 = vadd.f32 %v454, %v455
        %v457 = vrot.slane %v456, 1
        %v458 = vadd.f32 %v456, %v457
        %v459 = vadd.f32 %v311, %v315
        %v460 = vrot.slane %v459, 4
        %v461 = vadd.f32 %v459, %v460
        %v462 = vrot.slane %v461, 2
        %v463 = vadd.f32 %v461, %v462
        %v464 = vrot.slane %v463, 1
        %v465 = vadd.f32 %v463, %v464
        %v466 = vadd.f32 %v312, %v316
        %v467 = vrot.slane %v466, 4
        %v468 = vadd.f32 %v466, %v467
        %v469 = vrot.slane %v468, 2
        %v470 = vadd.f32 %v468, %v469
        %v471 = vrot.slane %v470, 1
        %v472 = vadd.f32 %v470, %v471
        %473 = vmatprep.subr.mxu0 0.0
        %474 = vmatpush1.msra.mxu0 %v317
        %475 = vmatprep.subr.mxu0 0.0
        %476 = vmatpush1.msra.mxu0 %v318
        %477 = vmatprep.subr.mxu0 0.0
        %478 = vmatpush1.msra.mxu0 %v319
        %479 = vmatprep.subr.mxu0 0.0
        %480 = vmatpush1.msra.mxu0 %v320
        %481 = vmatprep.subr.mxu0 0.0
        %482 = vmatpush1.msra.mxu0 %v321
        %483 = vmatprep.subr.mxu0 0.0
        %484 = vmatpush1.msra.mxu0 %v322
        %485 = vmatprep.subr.mxu0 0.0
        %486 = vmatpush1.msra.mxu0 %v323
        %487 = vmatprep.subr.mxu0 0.0
        %488 = vmatpush1.msra.mxu0 %v324
        %489 = vmatprep.subr.mxu0 0.0
        %490 = vmatpush1.msra.mxu0 %v325
        %491 = vmatprep.subr.mxu0 0.0
        %492 = vmatpush1.msra.mxu0 %v326
        %493 = vmatprep.subr.mxu0 0.0
        %494 = vmatpush1.msra.mxu0 %v327
        %495 = vmatprep.subr.mxu0 0.0
        %496 = vmatpush1.msra.mxu0 %v328
        %497 = vmatprep.subr.mxu0 0.0
        %498 = vmatpush1.msra.mxu0 %v329
        %499 = vmatprep.subr.mxu0 0.0
        %500 = vmatpush1.msra.mxu0 %v330
        %501 = vmatprep.subr.mxu0 0.0
        %502 = vmatpush1.msra.mxu0 %v331
        %503 = vmatprep.subr.mxu0 0.0
        %504 = vmatpush1.msra.mxu0 %v332
        %505 = vmatprep.subr.mxu0 0.0
        %506 = vmatpush1.msra.mxu0 %v333
        %507 = vmatprep.subr.mxu0 0.0
        %508 = vmatpush1.msra.mxu0 %v334
        %509 = vmatprep.subr.mxu0 0.0
        %510 = vmatpush1.msra.mxu0 %v335
        %511 = vmatprep.subr.mxu0 0.0
        %512 = vmatpush1.msra.mxu0 %v336
        %513 = vmatprep.subr.mxu0 0.0
        %514 = vmatpush1.msra.mxu0 %v337
        %515 = vmatprep.subr.mxu0 0.0
        %516 = vmatpush1.msra.mxu0 %v338
        %517 = vmatprep.subr.mxu0 0.0
        %518 = vmatpush1.msra.mxu0 %v339
        %519 = vmatprep.subr.mxu0 0.0
        %520 = vmatpush1.msra.mxu0 %v340
        %521 = vmatprep.subr.mxu0 0.0
        %522 = vmatpush1.msra.mxu0 %v341
        %523 = vmatprep.subr.mxu0 0.0
        %524 = vmatpush1.msra.mxu0 %v342
        %525 = vmatprep.subr.mxu0 0.0
        %526 = vmatpush1.msra.mxu0 %v343
        %527 = vmatprep.subr.mxu0 0.0
        %528 = vmatpush1.msra.mxu0 %v344
        %529 = vmatprep.subr.mxu0 0.0
        %530 = vmatpush1.msra.mxu0 %v345
        %531 = vmatprep.subr.mxu0 0.0
        %532 = vmatpush1.msra.mxu0 %v346
        %533 = vmatprep.subr.mxu0 0.0
        %534 = vmatpush1.msra.mxu0 %v347
        %535 = vmatprep.subr.mxu0 0.0
        %536 = vmatpush1.msra.mxu0 %v348
        %537 = vmatprep.mubr.f32.mxu0 %v458
        %538 = vmatmul.mubr.f32.gmra.mrb[0].mxu0 %v451
        %v539 = vpop.f32.mrb[0].mxu0
        %v540 = vadd.f32 0.0, %v539
        %v541 = vpop.f32.mrb[0].mxu0
        %542 = vdwg.mxu0
        %543 = vmatprep.subr.mxu0 0.0
        %544 = vmatpush1.msra.mxu0 %v349
        %545 = vmatprep.subr.mxu0 0.0
        %546 = vmatpush1.msra.mxu0 %v350
        %547 = vmatprep.subr.mxu0 0.0
        %548 = vmatpush1.msra.mxu0 %v351
        %549 = vmatprep.subr.mxu0 0.0
        %550 = vmatpush1.msra.mxu0 %v352
        %551 = vmatprep.subr.mxu0 0.0
        %552 = vmatpush1.msra.mxu0 %v353
        %553 = vmatprep.subr.mxu0 0.0
        %554 = vmatpush1.msra.mxu0 %v354
        %555 = vmatprep.subr.mxu0 0.0
        %556 = vmatpush1.msra.mxu0 %v355
        %557 = vmatprep.subr.mxu0 0.0
        %558 = vmatpush1.msra.mxu0 %v356
        %559 = vmatprep.subr.mxu0 0.0
        %560 = vmatpush1.msra.mxu0 %v357
        %561 = vmatprep.subr.mxu0 0.0
        %562 = vmatpush1.msra.mxu0 %v358
        %563 = vmatprep.subr.mxu0 0.0
        %564 = vmatpush1.msra.mxu0 %v359
        %565 = vmatprep.subr.mxu0 0.0
        %566 = vmatpush1.msra.mxu0 %v360
        %567 = vmatprep.subr.mxu0 0.0
        %568 = vmatpush1.msra.mxu0 %v361
        %569 = vmatprep.subr.mxu0 0.0
        %570 = vmatpush1.msra.mxu0 %v362
        %571 = vmatprep.subr.mxu0 0.0
        %572 = vmatpush1.msra.mxu0 %v363
        %573 = vmatprep.subr.mxu0 0.0
        %574 = vmatpush1.msra.mxu0 %v364
        %575 = vmatprep.subr.mxu0 0.0
        %576 = vmatpush1.msra.mxu0 %v365
        %577 = vmatprep.subr.mxu0 0.0
        %578 = vmatpush1.msra.mxu0 %v366
        %579 = vmatprep.subr.mxu0 0.0
        %580 = vmatpush1.msra.mxu0 %v367
        %581 = vmatprep.subr.mxu0 0.0
        %582 = vmatpush1.msra.mxu0 %v368
        %583 = vmatprep.subr.mxu0 0.0
        %584 = vmatpush1.msra.mxu0 %v369
        %585 = vmatprep.subr.mxu0 0.0
        %586 = vmatpush1.msra.mxu0 %v370
        %587 = vmatprep.subr.mxu0 0.0
        %588 = vmatpush1.msra.mxu0 %v371
        %589 = vmatprep.subr.mxu0 0.0
        %590 = vmatpush1.msra.mxu0 %v372
        %591 = vmatprep.subr.mxu0 0.0
        %592 = vmatpush1.msra.mxu0 %v373
        %593 = vmatprep.subr.mxu0 0.0
        %594 = vmatpush1.msra.mxu0 %v374
        %595 = vmatprep.subr.mxu0 0.0
        %596 = vmatpush1.msra.mxu0 %v375
        %597 = vmatprep.subr.mxu0 0.0
        %598 = vmatpush1.msra.mxu0 %v376
        %599 = vmatprep.subr.mxu0 0.0
        %600 = vmatpush1.msra.mxu0 %v377
        %601 = vmatprep.subr.mxu0 0.0
        %602 = vmatpush1.msra.mxu0 %v378
        %603 = vmatprep.subr.mxu0 0.0
        %604 = vmatpush1.msra.mxu0 %v379
        %605 = vmatprep.subr.mxu0 0.0
        %606 = vmatpush1.msra.mxu0 %v380
        %607 = vmatprep.mubr.f32.mxu0 %v472
        %608 = vmatmul.mubr.f32.gmra.mrb[0].mxu0 %v465
        %v609 = vpop.f32.mrb[0].mxu0
        %v610 = vadd.f32 %v540, %v609
        %v611 = vpop.f32.mrb[0].mxu0
        %612 = vdwg.mxu0
        %v613 = vmul.f32 %v610, 0.00390625
        %614 = vrot.lane.b32.xlu0 %v309, 96
        %v615 = vpop.permute.xlu0 %614
        %616 = vrot.lane.b32.xlu0 %v313, 96
        %v617 = vpop.permute.xlu0 %616
        %618 = vrot.lane.b32.xlu0 %v310, 96
        %v619 = vpop.permute.xlu0 %618
        %620 = vrot.lane.b32.xlu0 %v314, 96
        %v621 = vpop.permute.xlu0 %620
        %622 = vrot.lane.b32.xlu0 %v311, 96
        %v623 = vpop.permute.xlu0 %622
        %624 = vrot.lane.b32.xlu0 %v315, 96
        %v625 = vpop.permute.xlu0 %624
        %626 = vrot.lane.b32.xlu0 %v312, 96
        %v627 = vpop.permute.xlu0 %626
        %628 = vrot.lane.b32.xlu0 %v316, 96
        %v629 = vpop.permute.xlu0 %628
        %v630 = vlaneseq
        %v631 = vand.u32 %v630, 127
        %vm632 = vcmp.lt.s32.totalorder %v631, 96
        %v633 = vsel %vm632, %v623, %v627
        %v634 = vsel %vm632, %v625, %v629
        %v635 = vsel %vm632, %v619, %v623
        %v636 = vsel %vm632, %v621, %v625
        %v637 = vsel %vm632, %v615, %v619
        %v638 = vsel %vm632, %v617, %v621
        %v639 = vsel %vm632, %v627, %v615
        %v640 = vsel %vm632, %v629, %v617
        %v641 = vmax.f32 %v309, %v637
        %v642 = vmax.f32 %v310, %v635
        %v643 = vmax.f32 %v311, %v633
        %v644 = vmax.f32 %v312, %v639
        %v645 = vmax.f32 %v313, %v638
        %v646 = vmax.f32 %v314, %v636
        %v647 = vmax.f32 %v315, %v634
        %v648 = vmax.f32 %v316, %v640
        %649 = vrot.lane.b32.xlu0 %v641, 64
        %v650 = vpop.permute.xlu0 %649
        %651 = vrot.lane.b32.xlu0 %v645, 64
        %v652 = vpop.permute.xlu0 %651
        %653 = vrot.lane.b32.xlu0 %v642, 64
        %v654 = vpop.permute.xlu0 %653
        %655 = vrot.lane.b32.xlu0 %v646, 64
        %v656 = vpop.permute.xlu0 %655
        %657 = vrot.lane.b32.xlu0 %v643, 64
        %v658 = vpop.permute.xlu0 %657
        %659 = vrot.lane.b32.xlu0 %v647, 64
        %v660 = vpop.permute.xlu0 %659
        %661 = vrot.lane.b32.xlu0 %v644, 64
        %v662 = vpop.permute.xlu0 %661
        %663 = vrot.lane.b32.xlu0 %v648, 64
        %v664 = vpop.permute.xlu0 %663
        %vm665 = vcmp.lt.s32.totalorder %v631, 64
        %v666 = vsel %vm665, %v658, %v662
        %v667 = vsel %vm665, %v660, %v664
        %v668 = vsel %vm665, %v654, %v658
        %v669 = vsel %vm665, %v656, %v660
        %v670 = vsel %vm665, %v650, %v654
        %v671 = vsel %vm665, %v652, %v656
        %v672 = vsel %vm665, %v662, %v650
        %v673 = vsel %vm665, %v664, %v652
        %v674 = vmax.f32 %v641, %v670
        %v675 = vmax.f32 %v642, %v668
        %v676 = vmax.f32 %v643, %v666
        %v677 = vmax.f32 %v644, %v672
        %v678 = vmax.f32 %v645, %v671
        %v679 = vmax.f32 %v646, %v669
        %v680 = vmax.f32 %v647, %v667
        %v681 = vmax.f32 %v648, %v673
        %v682 = vmax.f32 %v674, %v675
        %v683 = vmax.f32 %v676, %v677
        %v684 = vmax.f32 %v678, %v679
        %v685 = vmax.f32 %v680, %v681
        %v686 = vmax.f32 %v682, %v683
        %v687 = vmax.f32 %v684, %v685
        %v688 = vmax.f32 %v686, %v687
        %v689 = vrot.slane %v688, 4
        %v690 = vmax.f32 %v688, %v689
        %v691 = vrot.slane %v690, 2
        %v692 = vmax.f32 %v690, %v691
        %v693 = vrot.slane %v692, 1
        %v694 = vmax.f32 %v692, %v693
        %vm695 = vcmask 1040384
        %v696 = vsel %vm695, %v613, %v694
        %v697 = vld [vmem:[%s1] sm:$0xff]
        %v698 = vld [vmem:[%s1 + $0x8] sm:$0xff]
        %v699 = vld [vmem:[%s1 + $0x10] sm:$0xff]
        %v700 = vld [vmem:[%s1 + $0x18] sm:$0xff]
        %vm701 = vcmask 261120
        %v703 = vsel %vm701, %v696, 0
        %705 = vmatprep.subr.mxu0 0.0
        %706 = vmatpush1.msra.mxu0 %v697
        %707 = vmatprep.subr.mxu0 0.0
        %708 = vmatpush1.msra.mxu0 %v698
        %709 = vmatprep.subr.mxu0 0.0
        %710 = vmatpush1.msra.mxu0 %v699
        %711 = vmatprep.subr.mxu0 0.0
        %712 = vmatpush1.msra.mxu0 %v700
        %713 = vmatprep.subr.mxu0 0.0
        %714 = vmatpush1.msra.mxu0 0.0
        %715 = vmatprep.subr.mxu0 0.0
        %716 = vmatpush1.msra.mxu0 0.0
        %717 = vmatprep.subr.mxu0 0.0
        %718 = vmatpush1.msra.mxu0 0.0
        %719 = vmatprep.subr.mxu0 0.0
        %720 = vmatpush1.msra.mxu0 0.0
        %721 = vmatprep.subr.mxu0 0.0
        %722 = vmatpush1.msra.mxu0 0.0
        %723 = vmatprep.subr.mxu0 0.0
        %724 = vmatpush1.msra.mxu0 0.0
        %725 = vmatprep.subr.mxu0 0.0
        %726 = vmatpush1.msra.mxu0 0.0
        %727 = vmatprep.subr.mxu0 0.0
        %728 = vmatpush1.msra.mxu0 0.0
        %729 = vmatprep.subr.mxu0 0.0
        %730 = vmatpush1.msra.mxu0 0.0
        %731 = vmatprep.subr.mxu0 0.0
        %732 = vmatpush1.msra.mxu0 0.0
        %733 = vmatprep.subr.mxu0 0.0
        %734 = vmatpush1.msra.mxu0 0.0
        %735 = vmatprep.subr.mxu0 0.0
        %736 = vmatpush1.msra.mxu0 0.0
        %737 = vmatprep.subr.mxu0 0.0
        %738 = vmatpush1.msra.mxu0 0.0
        %739 = vmatprep.subr.mxu0 0.0
        %740 = vmatpush1.msra.mxu0 0.0
        %741 = vmatprep.subr.mxu0 0.0
        %742 = vmatpush1.msra.mxu0 0.0
        %743 = vmatprep.subr.mxu0 0.0
        %744 = vmatpush1.msra.mxu0 0.0
        %745 = vmatprep.subr.mxu0 0.0
        %746 = vmatpush1.msra.mxu0 0.0
        %747 = vmatprep.subr.mxu0 0.0
        %748 = vmatpush1.msra.mxu0 0.0
        %749 = vmatprep.subr.mxu0 0.0
        %750 = vmatpush1.msra.mxu0 0.0
        %751 = vmatprep.subr.mxu0 0.0
        %752 = vmatpush1.msra.mxu0 0.0
        %753 = vmatprep.subr.mxu0 0.0
        %754 = vmatpush1.msra.mxu0 0.0
        %755 = vmatprep.subr.mxu0 0.0
        %756 = vmatpush1.msra.mxu0 0.0
        %757 = vmatprep.subr.mxu0 0.0
        %758 = vmatpush1.msra.mxu0 0.0
        %759 = vmatprep.subr.mxu0 0.0
        %760 = vmatpush1.msra.mxu0 0.0
        %761 = vmatprep.subr.mxu0 0.0
        %762 = vmatpush1.msra.mxu0 0.0
        %763 = vmatprep.subr.mxu0 0.0
        %764 = vmatpush1.msra.mxu0 0.0
        %765 = vmatprep.subr.mxu0 0.0
        %766 = vmatpush1.msra.mxu0 0.0
        %767 = vmatprep.subr.mxu0 0.0
        %768 = vmatpush1.msra.mxu0 0.0
        %769 = vmatprep.mubr.f32.mxu0 0.0
        %770 = vmatmul.mubr.f32.gmra.mrb[0].mxu0 %v703
        %v771 = vpop.f32.mrb[0].mxu0
        %v772 = vadd.f32 0.0, %v771
        %v773 = vpop.f32.mrb[0].mxu0
        %774 = vdwg.mxu0
        %v775 = vmax.f32 %v772, 0.0
        %v776 = vld [vmem:[%s2] sm:$0xf]
        %vm777 = vcmask 31744
        %v779 = vsel %vm777, %v775, 0
        %vm781 = vcmask 1043456
        %v783 = vsel %vm781, %v776, 0
        %785 = vmatprep.subr.mxu0 0.0
        %786 = vmatpush1.msra.mxu0 %v783
        %787 = vmatprep.subr.mxu0 0.0
        %788 = vmatpush1.msra.mxu0 0.0
        %789 = vmatprep.subr.mxu0 0.0
        %790 = vmatpush1.msra.mxu0 0.0
        %791 = vmatprep.subr.mxu0 0.0
        %792 = vmatpush1.msra.mxu0 0.0
        %793 = vmatprep.subr.mxu0 0.0
        %794 = vmatpush1.msra.mxu0 0.0
        %795 = vmatprep.subr.mxu0 0.0
        %796 = vmatpush1.msra.mxu0 0.0
        %797 = vmatprep.subr.mxu0 0.0
        %798 = vmatpush1.msra.mxu0 0.0
        %799 = vmatprep.subr.mxu0 0.0
        %800 = vmatpush1.msra.mxu0 0.0
        %801 = vmatprep.subr.mxu0 0.0
        %802 = vmatpush1.msra.mxu0 0.0
        %803 = vmatprep.subr.mxu0 0.0
        %804 = vmatpush1.msra.mxu0 0.0
        %805 = vmatprep.subr.mxu0 0.0
        %806 = vmatpush1.msra.mxu0 0.0
        %807 = vmatprep.subr.mxu0 0.0
        %808 = vmatpush1.msra.mxu0 0.0
        %809 = vmatprep.subr.mxu0 0.0
        %810 = vmatpush1.msra.mxu0 0.0
        %811 = vmatprep.subr.mxu0 0.0
        %812 = vmatpush1.msra.mxu0 0.0
        %813 = vmatprep.subr.mxu0 0.0
        %814 = vmatpush1.msra.mxu0 0.0
        %815 = vmatprep.subr.mxu0 0.0
        %816 = vmatpush1.msra.mxu0 0.0
        %817 = vmatprep.subr.mxu0 0.0
        %818 = vmatpush1.msra.mxu0 0.0
        %819 = vmatprep.subr.mxu0 0.0
        %820 = vmatpush1.msra.mxu0 0.0
        %821 = vmatprep.subr.mxu0 0.0
        %822 = vmatpush1.msra.mxu0 0.0
        %823 = vmatprep.subr.mxu0 0.0
        %824 = vmatpush1.msra.mxu0 0.0
        %825 = vmatprep.subr.mxu0 0.0
        %826 = vmatpush1.msra.mxu0 0.0
        %827 = vmatprep.subr.mxu0 0.0
        %828 = vmatpush1.msra.mxu0 0.0
        %829 = vmatprep.subr.mxu0 0.0
        %830 = vmatpush1.msra.mxu0 0.0
        %831 = vmatprep.subr.mxu0 0.0
        %832 = vmatpush1.msra.mxu0 0.0
        %833 = vmatprep.subr.mxu0 0.0
        %834 = vmatpush1.msra.mxu0 0.0
        %835 = vmatprep.subr.mxu0 0.0
        %836 = vmatpush1.msra.mxu0 0.0
        %837 = vmatprep.subr.mxu0 0.0
        %838 = vmatpush1.msra.mxu0 0.0
        %839 = vmatprep.subr.mxu0 0.0
        %840 = vmatpush1.msra.mxu0 0.0
        %841 = vmatprep.subr.mxu0 0.0
        %842 = vmatpush1.msra.mxu0 0.0
        %843 = vmatprep.subr.mxu0 0.0
        %844 = vmatpush1.msra.mxu0 0.0
        %845 = vmatprep.subr.mxu0 0.0
        %846 = vmatpush1.msra.mxu0 0.0
        %847 = vmatprep.subr.mxu0 0.0
        %848 = vmatpush1.msra.mxu0 0.0
        %849 = vmatprep.mubr.f32.mxu0 0.0
        %850 = vmatmul.mubr.f32.gmra.mrb[0].mxu0 %v779
        %v851 = vpop.f32.mrb[0].mxu0
        %v852 = vadd.f32 0.0, %v851
        %v853 = vpop.f32.mrb[0].mxu0
        %854 = vdwg.mxu0
        %v856 = vrot.slane %v852, 1
        %v858 = vadd.f32 %v852, %v856
        %v859 = vxor.u32 %v858, 2147483648
        %v860 = vmul.f32 %v859, 1.442695
        %v861 = vpow.pop %v860
        %v862 = vadd.f32 %v861, 1.0
        %v863 = vrcp.pop %v862
        %v864 = vmul.f32 1.0, %v863
        %v866 = vsel %vm701, %v864, 0
        %v869 = vsel %vm701, %v317, 0
        %v872 = vsel %vm701, %v318, 0
        %v875 = vsel %vm701, %v319, 0
        %v878 = vsel %vm701, %v320, 0
        %v881 = vsel %vm701, %v321, 0
        %v884 = vsel %vm701, %v322, 0
        %v887 = vsel %vm701, %v323, 0
        %v890 = vsel %vm701, %v324, 0
        %v893 = vsel %vm701, %v325, 0
        %v896 = vsel %vm701, %v326, 0
        %v899 = vsel %vm701, %v327, 0
        %v902 = vsel %vm701, %v328, 0
        %v905 = vsel %vm701, %v329, 0
        %v908 = vsel %vm701, %v330, 0
        %v911 = vsel %vm701, %v331, 0
        %v914 = vsel %vm701, %v332, 0
        %v917 = vsel %vm701, %v333, 0
        %v920 = vsel %vm701, %v334, 0
        %v923 = vsel %vm701, %v335, 0
        %v926 = vsel %vm701, %v336, 0
        %v929 = vsel %vm701, %v337, 0
        %v932 = vsel %vm701, %v338, 0
        %v935 = vsel %vm701, %v339, 0
        %v938 = vsel %vm701, %v340, 0
        %v941 = vsel %vm701, %v341, 0
        %v944 = vsel %vm701, %v342, 0
        %v947 = vsel %vm701, %v343, 0
        %v950 = vsel %vm701, %v344, 0
        %v953 = vsel %vm701, %v345, 0
        %v956 = vsel %vm701, %v346, 0
        %v959 = vsel %vm701, %v347, 0
        %v962 = vsel %vm701, %v348, 0
        %v965 = vsel %vm701, %v349, 0
        %v968 = vsel %vm701, %v350, 0
        %v971 = vsel %vm701, %v351, 0
        %v974 = vsel %vm701, %v352, 0
        %v977 = vsel %vm701, %v353, 0
        %v980 = vsel %vm701, %v354, 0
        %v983 = vsel %vm701, %v355, 0
        %v986 = vsel %vm701, %v356, 0
        %v989 = vsel %vm701, %v357, 0
        %v992 = vsel %vm701, %v358, 0
        %v995 = vsel %vm701, %v359, 0
        %v998 = vsel %vm701, %v360, 0
        %v1001 = vsel %vm701, %v361, 0
        %v1004 = vsel %vm701, %v362, 0
        %v1007 = vsel %vm701, %v363, 0
        %v1010 = vsel %vm701, %v364, 0
        %v1013 = vsel %vm701, %v365, 0
        %v1016 = vsel %vm701, %v366, 0
        %v1019 = vsel %vm701, %v367, 0
        %v1022 = vsel %vm701, %v368, 0
        %v1025 = vsel %vm701, %v369, 0
        %v1028 = vsel %vm701, %v370, 0
        %v1031 = vsel %vm701, %v371, 0
        %v1034 = vsel %vm701, %v372, 0
        %v1037 = vsel %vm701, %v373, 0
        %v1040 = vsel %vm701, %v374, 0
        %v1043 = vsel %vm701, %v375, 0
        %v1046 = vsel %vm701, %v376, 0
        %v1049 = vsel %vm701, %v377, 0
        %v1052 = vsel %vm701, %v378, 0
        %v1055 = vsel %vm701, %v379, 0
        %v1058 = vsel %vm701, %v380, 0
        %1060 = vmatprep.subr.mxu0 0.0
        %1061 = vmatpush1.xpose.msra.mxu0 %v869
        %1062 = vmatprep.subr.mxu0 0.0
        %1063 = vmatpush1.xpose.msra.mxu0 %v872
        %1064 = vmatprep.subr.mxu0 0.0
        %1065 = vmatpush1.xpose.msra.mxu0 %v875
        %1066 = vmatprep.subr.mxu0 0.0
        %1067 = vmatpush1.xpose.msra.mxu0 %v878
        %1068 = vmatprep.subr.mxu0 0.0
        %1069 = vmatpush1.xpose.msra.mxu0 %v881
        %1070 = vmatprep.subr.mxu0 0.0
        %1071 = vmatpush1.xpose.msra.mxu0 %v884
        %1072 = vmatprep.subr.mxu0 0.0
        %1073 = vmatpush1.xpose.msra.mxu0 %v887
        %1074 = vmatprep.subr.mxu0 0.0
        %1075 = vmatpush1.xpose.msra.mxu0 %v890
        %1076 = vmatprep.subr.mxu0 0.0
        %1077 = vmatpush1.xpose.msra.mxu0 %v893
        %1078 = vmatprep.subr.mxu0 0.0
        %1079 = vmatpush1.xpose.msra.mxu0 %v896
        %1080 = vmatprep.subr.mxu0 0.0
        %1081 = vmatpush1.xpose.msra.mxu0 %v899
        %1082 = vmatprep.subr.mxu0 0.0
        %1083 = vmatpush1.xpose.msra.mxu0 %v902
        %1084 = vmatprep.subr.mxu0 0.0
        %1085 = vmatpush1.xpose.msra.mxu0 %v905
        %1086 = vmatprep.subr.mxu0 0.0
        %1087 = vmatpush1.xpose.msra.mxu0 %v908
        %1088 = vmatprep.subr.mxu0 0.0
        %1089 = vmatpush1.xpose.msra.mxu0 %v911
        %1090 = vmatprep.subr.mxu0 0.0
        %1091 = vmatpush1.xpose.msra.mxu0 %v914
        %1092 = vmatprep.subr.mxu0 0.0
        %1093 = vmatpush1.xpose.msra.mxu0 %v917
        %1094 = vmatprep.subr.mxu0 0.0
        %1095 = vmatpush1.xpose.msra.mxu0 %v920
        %1096 = vmatprep.subr.mxu0 0.0
        %1097 = vmatpush1.xpose.msra.mxu0 %v923
        %1098 = vmatprep.subr.mxu0 0.0
        %1099 = vmatpush1.xpose.msra.mxu0 %v926
        %1100 = vmatprep.subr.mxu0 0.0
        %1101 = vmatpush1.xpose.msra.mxu0 %v929
        %1102 = vmatprep.subr.mxu0 0.0
        %1103 = vmatpush1.xpose.msra.mxu0 %v932
        %1104 = vmatprep.subr.mxu0 0.0
        %1105 = vmatpush1.xpose.msra.mxu0 %v935
        %1106 = vmatprep.subr.mxu0 0.0
        %1107 = vmatpush1.xpose.msra.mxu0 %v938
        %1108 = vmatprep.subr.mxu0 0.0
        %1109 = vmatpush1.xpose.msra.mxu0 %v941
        %1110 = vmatprep.subr.mxu0 0.0
        %1111 = vmatpush1.xpose.msra.mxu0 %v944
        %1112 = vmatprep.subr.mxu0 0.0
        %1113 = vmatpush1.xpose.msra.mxu0 %v947
        %1114 = vmatprep.subr.mxu0 0.0
        %1115 = vmatpush1.xpose.msra.mxu0 %v950
        %1116 = vmatprep.subr.mxu0 0.0
        %1117 = vmatpush1.xpose.msra.mxu0 %v953
        %1118 = vmatprep.subr.mxu0 0.0
        %1119 = vmatpush1.xpose.msra.mxu0 %v956
        %1120 = vmatprep.subr.mxu0 0.0
        %1121 = vmatpush1.xpose.msra.mxu0 %v959
        %1122 = vmatprep.subr.mxu0 0.0
        %1123 = vmatpush1.xpose.msra.mxu0 %v962
        %1124 = vmatprep.mubr.f32.mxu0 0.0
        %1125 = vmatmul.mubr.f32.gmra.mrb[0].mxu0 %v866
        %v1126 = vpop.f32.mrb[0].mxu0
        %v1127 = vadd.f32 0.0, %v1126
        %v1128 = vpop.f32.mrb[0].mxu0
        %v1129 = vadd.f32 0.0, %v1128
        %1130 = vdwg.mxu0
        %1131 = vmatprep.subr.mxu0 0.0
        %1132 = vmatpush1.xpose.msra.mxu0 %v965
        %1133 = vmatprep.subr.mxu0 0.0
        %1134 = vmatpush1.xpose.msra.mxu0 %v968
        %1135 = vmatprep.subr.mxu0 0.0
        %1136 = vmatpush1.xpose.msra.mxu0 %v971
        %1137 = vmatprep.subr.mxu0 0.0
        %1138 = vmatpush1.xpose.msra.mxu0 %v974
        %1139 = vmatprep.subr.mxu0 0.0
        %1140 = vmatpush1.xpose.msra.mxu0 %v977
        %1141 = vmatprep.subr.mxu0 0.0
        %1142 = vmatpush1.xpose.msra.mxu0 %v980
        %1143 = vmatprep.subr.mxu0 0.0
        %1144 = vmatpush1.xpose.msra.mxu0 %v983
        %1145 = vmatprep.subr.mxu0 0.0
        %1146 = vmatpush1.xpose.msra.mxu0 %v986
        %1147 = vmatprep.subr.mxu0 0.0
        %1148 = vmatpush1.xpose.msra.mxu0 %v989
        %1149 = vmatprep.subr.mxu0 0.0
        %1150 = vmatpush1.xpose.msra.mxu0 %v992
        %1151 = vmatprep.subr.mxu0 0.0
        %1152 = vmatpush1.xpose.msra.mxu0 %v995
        %1153 = vmatprep.subr.mxu0 0.0
        %1154 = vmatpush1.xpose.msra.mxu0 %v998
        %1155 = vmatprep.subr.mxu0 0.0
        %1156 = vmatpush1.xpose.msra.mxu0 %v1001
        %1157 = vmatprep.subr.mxu0 0.0
        %1158 = vmatpush1.xpose.msra.mxu0 %v1004
        %1159 = vmatprep.subr.mxu0 0.0
        %1160 = vmatpush1.xpose.msra.mxu0 %v1007
        %1161 = vmatprep.subr.mxu0 0.0
        %1162 = vmatpush1.xpose.msra.mxu0 %v1010
        %1163 = vmatprep.subr.mxu0 0.0
        %1164 = vmatpush1.xpose.msra.mxu0 %v1013
        %1165 = vmatprep.subr.mxu0 0.0
        %1166 = vmatpush1.xpose.msra.mxu0 %v1016
        %1167 = vmatprep.subr.mxu0 0.0
        %1168 = vmatpush1.xpose.msra.mxu0 %v1019
        %1169 = vmatprep.subr.mxu0 0.0
        %1170 = vmatpush1.xpose.msra.mxu0 %v1022
        %1171 = vmatprep.subr.mxu0 0.0
        %1172 = vmatpush1.xpose.msra.mxu0 %v1025
        %1173 = vmatprep.subr.mxu0 0.0
        %1174 = vmatpush1.xpose.msra.mxu0 %v1028
        %1175 = vmatprep.subr.mxu0 0.0
        %1176 = vmatpush1.xpose.msra.mxu0 %v1031
        %1177 = vmatprep.subr.mxu0 0.0
        %1178 = vmatpush1.xpose.msra.mxu0 %v1034
        %1179 = vmatprep.subr.mxu0 0.0
        %1180 = vmatpush1.xpose.msra.mxu0 %v1037
        %1181 = vmatprep.subr.mxu0 0.0
        %1182 = vmatpush1.xpose.msra.mxu0 %v1040
        %1183 = vmatprep.subr.mxu0 0.0
        %1184 = vmatpush1.xpose.msra.mxu0 %v1043
        %1185 = vmatprep.subr.mxu0 0.0
        %1186 = vmatpush1.xpose.msra.mxu0 %v1046
        %1187 = vmatprep.subr.mxu0 0.0
        %1188 = vmatpush1.xpose.msra.mxu0 %v1049
        %1189 = vmatprep.subr.mxu0 0.0
        %1190 = vmatpush1.xpose.msra.mxu0 %v1052
        %1191 = vmatprep.subr.mxu0 0.0
        %1192 = vmatpush1.xpose.msra.mxu0 %v1055
        %1193 = vmatprep.subr.mxu0 0.0
        %1194 = vmatpush1.xpose.msra.mxu0 %v1058
        %1195 = vmatprep.mubr.f32.mxu0 0.0
        %1196 = vmatmul.mubr.f32.gmra.mrb[0].mxu0 %v866
        %v1197 = vpop.f32.mrb[0].mxu0
        %v1198 = vadd.f32 0.0, %v1197
        %v1199 = vpop.f32.mrb[0].mxu0
        %v1200 = vadd.f32 0.0, %v1199
        %1201 = vdwg.mxu0
        %v1202 = vlaneseq
        %v1203 = vshrl.u32 %v1202, 7
        %v1204 = vsub.s32 0, %v1203
        %v1205 = vrot.slane %v1127, %v1204
        %v1206 = vlaneseq
        %v1207 = vshrl.u32 %v1206, 7
        %v1208 = vsub.s32 0, %v1207
        %v1209 = vrot.slane %v1129, %v1208
        %v1210 = vlaneseq
        %v1211 = vshrl.u32 %v1210, 7
        %v1212 = vsub.s32 0, %v1211
        %v1213 = vrot.slane %v1198, %v1212
        %v1214 = vlaneseq
        %v1215 = vshrl.u32 %v1214, 7
        %v1216 = vsub.s32 0, %v1215
        %v1217 = vrot.slane %v1200, %v1216
        %v1218 = vmul.f32 %v309, %v1205
        %v1219 = vmul.f32 %v310, %v1209
        %v1220 = vmul.f32 %v311, %v1213
        %v1221 = vmul.f32 %v312, %v1217
        %v1222 = vmul.f32 %v313, %v1205
        %v1223 = vmul.f32 %v314, %v1209
        %v1224 = vmul.f32 %v315, %v1213
        %v1225 = vmul.f32 %v316, %v1217
        %1226 = vmatprep.subr.mxu0 0.0
        %1227 = vmatpush1.msra.mxu0 %v381
        %1228 = vmatprep.subr.mxu0 0.0
        %1229 = vmatpush1.msra.mxu0 %v382
        %1230 = vmatprep.subr.mxu0 0.0
        %1231 = vmatpush1.msra.mxu0 %v383
        %1232 = vmatprep.subr.mxu0 0.0
        %1233 = vmatpush1.msra.mxu0 %v384
        %1234 = vmatprep.subr.mxu0 0.0
        %1235 = vmatpush1.msra.mxu0 %v385
        %1236 = vmatprep.subr.mxu0 0.0
        %1237 = vmatpush1.msra.mxu0 %v386
        %1238 = vmatprep.subr.mxu0 0.0
        %1239 = vmatpush1.msra.mxu0 %v387
        %1240 = vmatprep.subr.mxu0 0.0
        %1241 = vmatpush1.msra.mxu0 %v388
        %1242 = vmatprep.subr.mxu0 0.0
        %1243 = vmatpush1.msra.mxu0 %v389
        %1244 = vmatprep.subr.mxu0 0.0
        %1245 = vmatpush1.msra.mxu0 %v390
        %1246 = vmatprep.subr.mxu0 0.0
        %1247 = vmatpush1.msra.mxu0 %v391
        %1248 = vmatprep.subr.mxu0 0.0
        %1249 = vmatpush1.msra.mxu0 %v392
        %1250 = vmatprep.subr.mxu0 0.0
        %1251 = vmatpush1.msra.mxu0 %v393
        %1252 = vmatprep.subr.mxu0 0.0
        %1253 = vmatpush1.msra.mxu0 %v394
        %1254 = vmatprep.subr.mxu0 0.0
        %1255 = vmatpush1.msra.mxu0 %v395
        %1256 = vmatprep.subr.mxu0 0.0
        %1257 = vmatpush1.msra.mxu0 %v396
        %1258 = vmatprep.subr.mxu0 0.0
        %1259 = vmatpush1.msra.mxu0 %v397
        %1260 = vmatprep.subr.mxu0 0.0
        %1261 = vmatpush1.msra.mxu0 %v398
        %1262 = vmatprep.subr.mxu0 0.0
        %1263 = vmatpush1.msra.mxu0 %v399
        %1264 = vmatprep.subr.mxu0 0.0
        %1265 = vmatpush1.msra.mxu0 %v400
        %1266 = vmatprep.subr.mxu0 0.0
        %1267 = vmatpush1.msra.mxu0 %v401
        %1268 = vmatprep.subr.mxu0 0.0
        %1269 = vmatpush1.msra.mxu0 %v402
        %1270 = vmatprep.subr.mxu0 0.0
        %1271 = vmatpush1.msra.mxu0 %v403
        %1272 = vmatprep.subr.mxu0 0.0
        %1273 = vmatpush1.msra.mxu0 %v404
        %1274 = vmatprep.subr.mxu0 0.0
        %1275 = vmatpush1.msra.mxu0 %v405
        %1276 = vmatprep.subr.mxu0 0.0
        %1277 = vmatpush1.msra.mxu0 %v406
        %1278 = vmatprep.subr.mxu0 0.0
        %1279 = vmatpush1.msra.mxu0 %v407
        %1280 = vmatprep.subr.mxu0 0.0
        %1281 = vmatpush1.msra.mxu0 %v408
        %1282 = vmatprep.subr.mxu0 0.0
        %1283 = vmatpush1.msra.mxu0 %v409
        %1284 = vmatprep.subr.mxu0 0.0
        %1285 = vmatpush1.msra.mxu0 %v410
        %1286 = vmatprep.subr.mxu0 0.0
        %1287 = vmatpush1.msra.mxu0 %v411
        %1288 = vmatprep.subr.mxu0 0.0
        %1289 = vmatpush1.msra.mxu0 %v412
        %1290 = vmatprep.mubr.f32.mxu0 %v1219
        %1291 = vmatmul.mubr.f32.gmra.mrb[0].mxu0 %v1218
        %v1292 = vpop.f32.mrb[0].mxu0
        %v1293 = vadd.f32 0.0, %v1292
        %v1294 = vpop.f32.mrb[0].mxu0
        %1295 = vmatprep.mubr.f32.mxu0 %v1223
        %1296 = vmatmul.mubr.f32.gmra.mrb[0].mxu0 %v1222
        %v1297 = vpop.f32.mrb[0].mxu0
        %v1298 = vadd.f32 0.0, %v1297
        %v1299 = vpop.f32.mrb[0].mxu0
        %1300 = vdwg.mxu0
        %1301 = vmatprep.subr.mxu0 0.0
        %1302 = vmatpush1.msra.mxu0 %v413
        %1303 = vmatprep.subr.mxu0 0.0
        %1304 = vmatpush1.msra.mxu0 %v414
        %1305 = vmatprep.subr.mxu0 0.0
        %1306 = vmatpush1.msra.mxu0 %v415
        %1307 = vmatprep.subr.mxu0 0.0
        %1308 = vmatpush1.msra.mxu0 %v416
        %1309 = vmatprep.subr.mxu0 0.0
        %1310 = vmatpush1.msra.mxu0 %v417
        %1311 = vmatprep.subr.mxu0 0.0
        %1312 = vmatpush1.msra.mxu0 %v418
        %1313 = vmatprep.subr.mxu0 0.0
        %1314 = vmatpush1.msra.mxu0 %v419
        %1315 = vmatprep.subr.mxu0 0.0
        %1316 = vmatpush1.msra.mxu0 %v420
        %1317 = vmatprep.subr.mxu0 0.0
        %1318 = vmatpush1.msra.mxu0 %v421
        %1319 = vmatprep.subr.mxu0 0.0
        %1320 = vmatpush1.msra.mxu0 %v422
        %1321 = vmatprep.subr.mxu0 0.0
        %1322 = vmatpush1.msra.mxu0 %v423
        %1323 = vmatprep.subr.mxu0 0.0
        %1324 = vmatpush1.msra.mxu0 %v424
        %1325 = vmatprep.subr.mxu0 0.0
        %1326 = vmatpush1.msra.mxu0 %v425
        %1327 = vmatprep.subr.mxu0 0.0
        %1328 = vmatpush1.msra.mxu0 %v426
        %1329 = vmatprep.subr.mxu0 0.0
        %1330 = vmatpush1.msra.mxu0 %v427
        %1331 = vmatprep.subr.mxu0 0.0
        %1332 = vmatpush1.msra.mxu0 %v428
        %1333 = vmatprep.subr.mxu0 0.0
        %1334 = vmatpush1.msra.mxu0 %v429
        %1335 = vmatprep.subr.mxu0 0.0
        %1336 = vmatpush1.msra.mxu0 %v430
        %1337 = vmatprep.subr.mxu0 0.0
        %1338 = vmatpush1.msra.mxu0 %v431
        %1339 = vmatprep.subr.mxu0 0.0
        %1340 = vmatpush1.msra.mxu0 %v432
        %1341 = vmatprep.subr.mxu0 0.0
        %1342 = vmatpush1.msra.mxu0 %v433
        %1343 = vmatprep.subr.mxu0 0.0
        %1344 = vmatpush1.msra.mxu0 %v434
        %1345 = vmatprep.subr.mxu0 0.0
        %1346 = vmatpush1.msra.mxu0 %v435
        %1347 = vmatprep.subr.mxu0 0.0
        %1348 = vmatpush1.msra.mxu0 %v436
        %1349 = vmatprep.subr.mxu0 0.0
        %1350 = vmatpush1.msra.mxu0 %v437
        %1351 = vmatprep.subr.mxu0 0.0
        %1352 = vmatpush1.msra.mxu0 %v438
        %1353 = vmatprep.subr.mxu0 0.0
        %1354 = vmatpush1.msra.mxu0 %v439
        %1355 = vmatprep.subr.mxu0 0.0
        %1356 = vmatpush1.msra.mxu0 %v440
        %1357 = vmatprep.subr.mxu0 0.0
        %1358 = vmatpush1.msra.mxu0 %v441
        %1359 = vmatprep.subr.mxu0 0.0
        %1360 = vmatpush1.msra.mxu0 %v442
        %1361 = vmatprep.subr.mxu0 0.0
        %1362 = vmatpush1.msra.mxu0 %v443
        %1363 = vmatprep.subr.mxu0 0.0
        %1364 = vmatpush1.msra.mxu0 %v444
        %1365 = vmatprep.mubr.f32.mxu0 %v1221
        %1366 = vmatmul.mubr.f32.gmra.mrb[0].mxu0 %v1220
        %v1367 = vpop.f32.mrb[0].mxu0
        %v1368 = vadd.f32 %v1293, %v1367
        %v1369 = vpop.f32.mrb[0].mxu0
        %1370 = vmatprep.mubr.f32.mxu0 %v1225
        %1371 = vmatmul.mubr.f32.gmra.mrb[0].mxu0 %v1224
        %v1372 = vpop.f32.mrb[0].mxu0
        %v1373 = vadd.f32 %v1298, %v1372
        %v1374 = vpop.f32.mrb[0].mxu0
        %1375 = vdwg.mxu0
        %v1376 = vmul.f32 %v1368, 0.03125
        %v1377 = vmul.f32 %v1373, 0.03125
        %1378 = vrot.lane.b32.xlu0 %v1218, 127
        %v1379 = vpop.permute.xlu0 %1378
        %1380 = vrot.lane.b32.xlu0 %v1222, 127
        %v1381 = vpop.permute.xlu0 %1380
        %1382 = vrot.lane.b32.xlu0 %v1219, 127
        %v1383 = vpop.permute.xlu0 %1382
        %1384 = vrot.lane.b32.xlu0 %v1223, 127
        %v1385 = vpop.permute.xlu0 %1384
        %1386 = vrot.lane.b32.xlu0 %v1220, 127
        %v1387 = vpop.permute.xlu0 %1386
        %1388 = vrot.lane.b32.xlu0 %v1224, 127
        %v1389 = vpop.permute.xlu0 %1388
        %1390 = vrot.lane.b32.xlu0 %v1221, 127
        %v1391 = vpop.permute.xlu0 %1390
        %1392 = vrot.lane.b32.xlu0 %v1225, 127
        %v1393 = vpop.permute.xlu0 %1392
        %vm1394 = vcmp.lt.s32.totalorder %v631, 127
        %v1395 = vsel %vm1394, %v1387, %v1391
        %v1396 = vsel %vm1394, %v1389, %v1393
        %v1397 = vsel %vm1394, %v1383, %v1387
        %v1398 = vsel %vm1394, %v1385, %v1389
        %v1399 = vsel %vm1394, %v1379, %v1383
        %v1400 = vsel %vm1394, %v1381, %v1385
        %v1401 = vsel %vm1394, %v1391, %v1379
        %v1402 = vsel %vm1394, %v1393, %v1381
        %v1403 = vmax.f32 %v1218, %v1399
        %v1404 = vmax.f32 %v1219, %v1397
        %v1405 = vmax.f32 %v1220, %v1395
        %v1406 = vmax.f32 %v1221, %v1401
        %v1407 = vmax.f32 %v1222, %v1400
        %v1408 = vmax.f32 %v1223, %v1398
        %v1409 = vmax.f32 %v1224, %v1396
        %v1410 = vmax.f32 %v1225, %v1402
        %1411 = vrot.lane.b32.xlu0 %v1403, 126
        %v1412 = vpop.permute.xlu0 %1411
        %1413 = vrot.lane.b32.xlu0 %v1407, 126
        %v1414 = vpop.permute.xlu0 %1413
        %1415 = vrot.lane.b32.xlu0 %v1404, 126
        %v1416 = vpop.permute.xlu0 %1415
        %1417 = vrot.lane.b32.xlu0 %v1408, 126
        %v1418 = vpop.permute.xlu0 %1417
        %1419 = vrot.lane.b32.xlu0 %v1405, 126
        %v1420 = vpop.permute.xlu0 %1419
        %1421 = vrot.lane.b32.xlu0 %v1409, 126
        %v1422 = vpop.permute.xlu0 %1421
        %1423 = vrot.lane.b32.xlu0 %v1406, 126
        %v1424 = vpop.permute.xlu0 %1423
        %1425 = vrot.lane.b32.xlu0 %v1410, 126
        %v1426 = vpop.permute.xlu0 %1425
        %vm1427 = vcmp.lt.s32.totalorder %v631, 126
        %v1428 = vsel %vm1427, %v1420, %v1424
        %v1429 = vsel %vm1427, %v1422, %v1426
        %v1430 = vsel %vm1427, %v1416, %v1420
        %v1431 = vsel %vm1427, %v1418, %v1422
        %v1432 = vsel %vm1427, %v1412, %v1416
        %v1433 = vsel %vm1427, %v1414, %v1418
        %v1434 = vsel %vm1427, %v1424, %v1412
        %v1435 = vsel %vm1427, %v1426, %v1414
        %v1436 = vmax.f32 %v1403, %v1432
        %v1437 = vmax.f32 %v1404, %v1430
        %v1438 = vmax.f32 %v1405, %v1428
        %v1439 = vmax.f32 %v1406, %v1434
        %v1440 = vmax.f32 %v1407, %v1433
        %v1441 = vmax.f32 %v1408, %v1431
        %v1442 = vmax.f32 %v1409, %v1429
        %v1443 = vmax.f32 %v1410, %v1435
        %1444 = vrot.lane.b32.xlu0 %v1436, 124
        %v1445 = vpop.permute.xlu0 %1444
        %1446 = vrot.lane.b32.xlu0 %v1440, 124
        %v1447 = vpop.permute.xlu0 %1446
        %1448 = vrot.lane.b32.xlu0 %v1437, 124
        %v1449 = vpop.permute.xlu0 %1448
        %1450 = vrot.lane.b32.xlu0 %v1441, 124
        %v1451 = vpop.permute.xlu0 %1450
        %1452 = vrot.lane.b32.xlu0 %v1438, 124
        %v1453 = vpop.permute.xlu0 %1452
        %1454 = vrot.lane.b32.xlu0 %v1442, 124
        %v1455 = vpop.permute.xlu0 %1454
        %1456 = vrot.lane.b32.xlu0 %v1439, 124
        %v1457 = vpop.permute.xlu0 %1456
        %1458 = vrot.lane.b32.xlu0 %v1443, 124
        %v1459 = vpop.permute.xlu0 %1458
        %vm1460 = vcmp.lt.s32.totalorder %v631, 124
        %v1461 = vsel %vm1460, %v1453, %v1457
        %v1462 = vsel %vm1460, %v1455, %v1459
        %v1463 = vsel %vm1460, %v1449, %v1453
        %v1464 = vsel %vm1460, %v1451, %v1455
        %v1465 = vsel %vm1460, %v1445, %v1449
        %v1466 = vsel %vm1460, %v1447, %v1451
        %v1467 = vsel %vm1460, %v1457, %v1445
        %v1468 = vsel %vm1460, %v1459, %v1447
        %v1469 = vmax.f32 %v1436, %v1465
        %v1470 = vmax.f32 %v1437, %v1463
        %v1471 = vmax.f32 %v1438, %v1461
        %v1472 = vmax.f32 %v1439, %v1467
        %v1473 = vmax.f32 %v1440, %v1466
        %v1474 = vmax.f32 %v1441, %v1464
        %v1475 = vmax.f32 %v1442, %v1462
        %v1476 = vmax.f32 %v1443, %v1468
        %1477 = vrot.lane.b32.xlu0 %v1469, 120
        %v1478 = vpop.permute.xlu0 %1477
        %1479 = vrot.lane.b32.xlu0 %v1473, 120
        %v1480 = vpop.permute.xlu0 %1479
        %1481 = vrot.lane.b32.xlu0 %v1470, 120
        %v1482 = vpop.permute.xlu0 %1481
        %1483 = vrot.lane.b32.xlu0 %v1474, 120
        %v1484 = vpop.permute.xlu0 %1483
        %1485 = vrot.lane.b32.xlu0 %v1471, 120
        %v1486 = vpop.permute.xlu0 %1485
        %1487 = vrot.lane.b32.xlu0 %v1475, 120
        %v1488 = vpop.permute.xlu0 %1487
        %1489 = vrot.lane.b32.xlu0 %v1472, 120
        %v1490 = vpop.permute.xlu0 %1489
        %1491 = vrot.lane.b32.xlu0 %v1476, 120
        %v1492 = vpop.permute.xlu0 %1491
        %vm1493 = vcmp.lt.s32.totalorder %v631, 120
        %v1494 = vsel %vm1493, %v1486, %v1490
        %v1495 = vsel %vm1493, %v1488, %v1492
        %v1496 = vsel %vm1493, %v1482, %v1486
        %v1497 = vsel %vm1493, %v1484, %v1488
        %v1498 = vsel %vm1493, %v1478, %v1482
        %v1499 = vsel %vm1493, %v1480, %v1484
        %v1500 = vsel %vm1493, %v1490, %v1478
        %v1501 = vsel %vm1493, %v1492, %v1480
        %v1502 = vmax.f32 %v1469, %v1498
        %v1503 = vmax.f32 %v1470, %v1496
        %v1504 = vmax.f32 %v1471, %v1494
        %v1505 = vmax.f32 %v1472, %v1500
        %v1506 = vmax.f32 %v1473, %v1499
        %v1507 = vmax.f32 %v1474, %v1497
        %v1508 = vmax.f32 %v1475, %v1495
        %v1509 = vmax.f32 %v1476, %v1501
        %1510 = vrot.lane.b32.xlu0 %v1502, 112
        %v1511 = vpop.permute.xlu0 %1510
        %1512 = vrot.lane.b32.xlu0 %v1506, 112
        %v1513 = vpop.permute.xlu0 %1512
        %1514 = vrot.lane.b32.xlu0 %v1503, 112
        %v1515 = vpop.permute.xlu0 %1514
        %1516 = vrot.lane.b32.xlu0 %v1507, 112
        %v1517 = vpop.permute.xlu0 %1516
        %1518 = vrot.lane.b32.xlu0 %v1504, 112
        %v1519 = vpop.permute.xlu0 %1518
        %1520 = vrot.lane.b32.xlu0 %v1508, 112
        %v1521 = vpop.permute.xlu0 %1520
        %1522 = vrot.lane.b32.xlu0 %v1505, 112
        %v1523 = vpop.permute.xlu0 %1522
        %1524 = vrot.lane.b32.xlu0 %v1509, 112
        %v1525 = vpop.permute.xlu0 %1524
        %vm1526 = vcmp.lt.s32.totalorder %v631, 112
        %v1527 = vsel %vm1526, %v1519, %v1523
        %v1528 = vsel %vm1526, %v1521, %v1525
        %v1529 = vsel %vm1526, %v1515, %v1519
        %v1530 = vsel %vm1526, %v1517, %v1521
        %v1531 = vsel %vm1526, %v1511, %v1515
        %v1532 = vsel %vm1526, %v1513, %v1517
        %v1533 = vsel %vm1526, %v1523, %v1511
        %v1534 = vsel %vm1526, %v1525, %v1513
        %v1535 = vmax.f32 %v1502, %v1531
        %v1536 = vmax.f32 %v1503, %v1529
        %v1537 = vmax.f32 %v1504, %v1527
        %v1538 = vmax.f32 %v1505, %v1533
        %v1539 = vmax.f32 %v1506, %v1532
        %v1540 = vmax.f32 %v1507, %v1530
        %v1541 = vmax.f32 %v1508, %v1528
        %v1542 = vmax.f32 %v1509, %v1534
        %v1543 = vld [vmem:[%s5] sm:$0xff]
        %v1544 = vld [vmem:[%s5 + $0x8] sm:$0xff]
        %v1545 = vld [vmem:[%s5 + $0x10] sm:$0xff]
        %v1546 = vld [vmem:[%s5 + $0x18] sm:$0xff]
        %v1547 = vld [vmem:[%s5 + $0x20] sm:$0xff]
        %v1548 = vld [vmem:[%s5 + $0x28] sm:$0xff]
        %v1549 = vld [vmem:[%s5 + $0x30] sm:$0xff]
        %v1550 = vld [vmem:[%s5 + $0x38] sm:$0xff]
        %v1551 = vld [vmem:[%s5 + $0x40] sm:$0xff]
        %v1552 = vld [vmem:[%s5 + $0x48] sm:$0xff]
        %v1553 = vld [vmem:[%s5 + $0x50] sm:$0xff]
        %v1554 = vld [vmem:[%s5 + $0x58] sm:$0xff]
        %v1555 = vld [vmem:[%s5 + $0x60] sm:$0xff]
        %v1556 = vld [vmem:[%s5 + $0x68] sm:$0xff]
        %v1557 = vld [vmem:[%s5 + $0x70] sm:$0xff]
        %v1558 = vld [vmem:[%s5 + $0x78] sm:$0xff]
        %v1559 = vld [vmem:[%s5 + $0x80] sm:$0xff]
        %v1560 = vld [vmem:[%s5 + $0x88] sm:$0xff]
        %v1561 = vld [vmem:[%s5 + $0x90] sm:$0xff]
        %v1562 = vld [vmem:[%s5 + $0x98] sm:$0xff]
        %v1563 = vld [vmem:[%s5 + $0xa0] sm:$0xff]
        %v1564 = vld [vmem:[%s5 + $0xa8] sm:$0xff]
        %v1565 = vld [vmem:[%s5 + $0xb0] sm:$0xff]
        %v1566 = vld [vmem:[%s5 + $0xb8] sm:$0xff]
        %v1567 = vld [vmem:[%s5 + $0xc0] sm:$0xff]
        %v1568 = vld [vmem:[%s5 + $0xc8] sm:$0xff]
        %v1569 = vld [vmem:[%s5 + $0xd0] sm:$0xff]
        %v1570 = vld [vmem:[%s5 + $0xd8] sm:$0xff]
        %v1571 = vld [vmem:[%s5 + $0xe0] sm:$0xff]
        %v1572 = vld [vmem:[%s5 + $0xe8] sm:$0xff]
        %v1573 = vld [vmem:[%s5 + $0xf0] sm:$0xff]
        %v1574 = vld [vmem:[%s5 + $0xf8] sm:$0xff]
        %v1575 = vld [vmem:[%s5 + $0x100] sm:$0xff]
        %v1576 = vld [vmem:[%s5 + $0x108] sm:$0xff]
        %v1577 = vld [vmem:[%s5 + $0x110] sm:$0xff]
        %v1578 = vld [vmem:[%s5 + $0x118] sm:$0xff]
        %v1579 = vld [vmem:[%s5 + $0x120] sm:$0xff]
        %v1580 = vld [vmem:[%s5 + $0x128] sm:$0xff]
        %v1581 = vld [vmem:[%s5 + $0x130] sm:$0xff]
        %v1582 = vld [vmem:[%s5 + $0x138] sm:$0xff]
        %v1583 = vld [vmem:[%s5 + $0x140] sm:$0xff]
        %v1584 = vld [vmem:[%s5 + $0x148] sm:$0xff]
        %v1585 = vld [vmem:[%s5 + $0x150] sm:$0xff]
        %v1586 = vld [vmem:[%s5 + $0x158] sm:$0xff]
        %v1587 = vld [vmem:[%s5 + $0x160] sm:$0xff]
        %v1588 = vld [vmem:[%s5 + $0x168] sm:$0xff]
        %v1589 = vld [vmem:[%s5 + $0x170] sm:$0xff]
        %v1590 = vld [vmem:[%s5 + $0x178] sm:$0xff]
        %v1591 = vld [vmem:[%s5 + $0x180] sm:$0xff]
        %v1592 = vld [vmem:[%s5 + $0x188] sm:$0xff]
        %v1593 = vld [vmem:[%s5 + $0x190] sm:$0xff]
        %v1594 = vld [vmem:[%s5 + $0x198] sm:$0xff]
        %v1595 = vld [vmem:[%s5 + $0x1a0] sm:$0xff]
        %v1596 = vld [vmem:[%s5 + $0x1a8] sm:$0xff]
        %v1597 = vld [vmem:[%s5 + $0x1b0] sm:$0xff]
        %v1598 = vld [vmem:[%s5 + $0x1b8] sm:$0xff]
        %v1599 = vld [vmem:[%s5 + $0x1c0] sm:$0xff]
        %v1600 = vld [vmem:[%s5 + $0x1c8] sm:$0xff]
        %v1601 = vld [vmem:[%s5 + $0x1d0] sm:$0xff]
        %v1602 = vld [vmem:[%s5 + $0x1d8] sm:$0xff]
        %v1603 = vld [vmem:[%s5 + $0x1e0] sm:$0xff]
        %v1604 = vld [vmem:[%s5 + $0x1e8] sm:$0xff]
        %v1605 = vld [vmem:[%s5 + $0x1f0] sm:$0xff]
        %v1606 = vld [vmem:[%s5 + $0x1f8] sm:$0xff]
        %1607 = vmatprep.subr.mxu0 0.0
        %1608 = vmatpush1.msra.mxu0 %v1543
        %1609 = vmatprep.subr.mxu0 0.0
        %1610 = vmatpush1.msra.mxu0 %v1544
        %1611 = vmatprep.subr.mxu0 0.0
        %1612 = vmatpush1.msra.mxu0 %v1545
        %1613 = vmatprep.subr.mxu0 0.0
        %1614 = vmatpush1.msra.mxu0 %v1546
        %1615 = vmatprep.subr.mxu0 0.0
        %1616 = vmatpush1.msra.mxu0 %v1547
        %1617 = vmatprep.subr.mxu0 0.0
        %1618 = vmatpush1.msra.mxu0 %v1548
        %1619 = vmatprep.subr.mxu0 0.0
        %1620 = vmatpush1.msra.mxu0 %v1549
        %1621 = vmatprep.subr.mxu0 0.0
        %1622 = vmatpush1.msra.mxu0 %v1550
        %1623 = vmatprep.subr.mxu0 0.0
        %1624 = vmatpush1.msra.mxu0 %v1551
        %1625 = vmatprep.subr.mxu0 0.0
        %1626 = vmatpush1.msra.mxu0 %v1552
        %1627 = vmatprep.subr.mxu0 0.0
        %1628 = vmatpush1.msra.mxu0 %v1553
        %1629 = vmatprep.subr.mxu0 0.0
        %1630 = vmatpush1.msra.mxu0 %v1554
        %1631 = vmatprep.subr.mxu0 0.0
        %1632 = vmatpush1.msra.mxu0 %v1555
        %1633 = vmatprep.subr.mxu0 0.0
        %1634 = vmatpush1.msra.mxu0 %v1556
        %1635 = vmatprep.subr.mxu0 0.0
        %1636 = vmatpush1.msra.mxu0 %v1557
        %1637 = vmatprep.subr.mxu0 0.0
        %1638 = vmatpush1.msra.mxu0 %v1558
        %1639 = vmatprep.subr.mxu0 0.0
        %1640 = vmatpush1.msra.mxu0 %v1559
        %1641 = vmatprep.subr.mxu0 0.0
        %1642 = vmatpush1.msra.mxu0 %v1560
        %1643 = vmatprep.subr.mxu0 0.0
        %1644 = vmatpush1.msra.mxu0 %v1561
        %1645 = vmatprep.subr.mxu0 0.0
        %1646 = vmatpush1.msra.mxu0 %v1562
        %1647 = vmatprep.subr.mxu0 0.0
        %1648 = vmatpush1.msra.mxu0 %v1563
        %1649 = vmatprep.subr.mxu0 0.0
        %1650 = vmatpush1.msra.mxu0 %v1564
        %1651 = vmatprep.subr.mxu0 0.0
        %1652 = vmatpush1.msra.mxu0 %v1565
        %1653 = vmatprep.subr.mxu0 0.0
        %1654 = vmatpush1.msra.mxu0 %v1566
        %1655 = vmatprep.subr.mxu0 0.0
        %1656 = vmatpush1.msra.mxu0 %v1567
        %1657 = vmatprep.subr.mxu0 0.0
        %1658 = vmatpush1.msra.mxu0 %v1568
        %1659 = vmatprep.subr.mxu0 0.0
        %1660 = vmatpush1.msra.mxu0 %v1569
        %1661 = vmatprep.subr.mxu0 0.0
        %1662 = vmatpush1.msra.mxu0 %v1570
        %1663 = vmatprep.subr.mxu0 0.0
        %1664 = vmatpush1.msra.mxu0 %v1571
        %1665 = vmatprep.subr.mxu0 0.0
        %1666 = vmatpush1.msra.mxu0 %v1572
        %1667 = vmatprep.subr.mxu0 0.0
        %1668 = vmatpush1.msra.mxu0 %v1573
        %1669 = vmatprep.subr.mxu0 0.0
        %1670 = vmatpush1.msra.mxu0 %v1574
        %1671 = vmatprep.mubr.f32.mxu0 %v1536
        %1672 = vmatmul.mubr.f32.gmra.mrb[0].mxu0 %v1535
        %v1673 = vpop.f32.mrb[0].mxu0
        %v1674 = vadd.f32 0.0, %v1673
        %v1675 = vpop.f32.mrb[0].mxu0
        %1676 = vmatprep.mubr.f32.mxu0 %v1540
        %1677 = vmatmul.mubr.f32.gmra.mrb[0].mxu0 %v1539
        %v1678 = vpop.f32.mrb[0].mxu0
        %v1679 = vadd.f32 0.0, %v1678
        %v1680 = vpop.f32.mrb[0].mxu0
        %1681 = vdwg.mxu0
        %1682 = vmatprep.subr.mxu0 0.0
        %1683 = vmatpush1.msra.mxu0 %v1575
        %1684 = vmatprep.subr.mxu0 0.0
        %1685 = vmatpush1.msra.mxu0 %v1576
        %1686 = vmatprep.subr.mxu0 0.0
        %1687 = vmatpush1.msra.mxu0 %v1577
        %1688 = vmatprep.subr.mxu0 0.0
        %1689 = vmatpush1.msra.mxu0 %v1578
        %1690 = vmatprep.subr.mxu0 0.0
        %1691 = vmatpush1.msra.mxu0 %v1579
        %1692 = vmatprep.subr.mxu0 0.0
        %1693 = vmatpush1.msra.mxu0 %v1580
        %1694 = vmatprep.subr.mxu0 0.0
        %1695 = vmatpush1.msra.mxu0 %v1581
        %1696 = vmatprep.subr.mxu0 0.0
        %1697 = vmatpush1.msra.mxu0 %v1582
        %1698 = vmatprep.subr.mxu0 0.0
        %1699 = vmatpush1.msra.mxu0 %v1583
        %1700 = vmatprep.subr.mxu0 0.0
        %1701 = vmatpush1.msra.mxu0 %v1584
        %1702 = vmatprep.subr.mxu0 0.0
        %1703 = vmatpush1.msra.mxu0 %v1585
        %1704 = vmatprep.subr.mxu0 0.0
        %1705 = vmatpush1.msra.mxu0 %v1586
        %1706 = vmatprep.subr.mxu0 0.0
        %1707 = vmatpush1.msra.mxu0 %v1587
        %1708 = vmatprep.subr.mxu0 0.0
        %1709 = vmatpush1.msra.mxu0 %v1588
        %1710 = vmatprep.subr.mxu0 0.0
        %1711 = vmatpush1.msra.mxu0 %v1589
        %1712 = vmatprep.subr.mxu0 0.0
        %1713 = vmatpush1.msra.mxu0 %v1590
        %1714 = vmatprep.subr.mxu0 0.0
        %1715 = vmatpush1.msra.mxu0 %v1591
        %1716 = vmatprep.subr.mxu0 0.0
        %1717 = vmatpush1.msra.mxu0 %v1592
        %1718 = vmatprep.subr.mxu0 0.0
        %1719 = vmatpush1.msra.mxu0 %v1593
        %1720 = vmatprep.subr.mxu0 0.0
        %1721 = vmatpush1.msra.mxu0 %v1594
        %1722 = vmatprep.subr.mxu0 0.0
        %1723 = vmatpush1.msra.mxu0 %v1595
        %1724 = vmatprep.subr.mxu0 0.0
        %1725 = vmatpush1.msra.mxu0 %v1596
        %1726 = vmatprep.subr.mxu0 0.0
        %1727 = vmatpush1.msra.mxu0 %v1597
        %1728 = vmatprep.subr.mxu0 0.0
        %1729 = vmatpush1.msra.mxu0 %v1598
        %1730 = vmatprep.subr.mxu0 0.0
        %1731 = vmatpush1.msra.mxu0 %v1599
        %1732 = vmatprep.subr.mxu0 0.0
        %1733 = vmatpush1.msra.mxu0 %v1600
        %1734 = vmatprep.subr.mxu0 0.0
        %1735 = vmatpush1.msra.mxu0 %v1601
        %1736 = vmatprep.subr.mxu0 0.0
        %1737 = vmatpush1.msra.mxu0 %v1602
        %1738 = vmatprep.subr.mxu0 0.0
        %1739 = vmatpush1.msra.mxu0 %v1603
        %1740 = vmatprep.subr.mxu0 0.0
        %1741 = vmatpush1.msra.mxu0 %v1604
        %1742 = vmatprep.subr.mxu0 0.0
        %1743 = vmatpush1.msra.mxu0 %v1605
        %1744 = vmatprep.subr.mxu0 0.0
        %1745 = vmatpush1.msra.mxu0 %v1606
        %1746 = vmatprep.mubr.f32.mxu0 %v1538
        %1747 = vmatmul.mubr.f32.gmra.mrb[0].mxu0 %v1537
        %v1748 = vpop.f32.mrb[0].mxu0
        %v1749 = vadd.f32 %v1674, %v1748
        %v1750 = vpop.f32.mrb[0].mxu0
        %1751 = vmatprep.mubr.f32.mxu0 %v1542
        %1752 = vmatmul.mubr.f32.gmra.mrb[0].mxu0 %v1541
        %v1753 = vpop.f32.mrb[0].mxu0
        %v1754 = vadd.f32 %v1679, %v1753
        %v1755 = vpop.f32.mrb[0].mxu0
        %1756 = vdwg.mxu0
        %1757 = vrot.lane.b32.xlu0 0.0, 3
        %v1758 = vpop.permute.xlu0 %1757
        %1759 = vrot.lane.b32.xlu0 %v1376, 3
        %v1760 = vpop.permute.xlu0 %1759
        %1761 = vrot.lane.b32.xlu0 %v1377, 3
        %v1762 = vpop.permute.xlu0 %1761
        %1763 = vrot.lane.b32.xlu0 %v1749, 3
        %v1764 = vpop.permute.xlu0 %1763
        %1765 = vrot.lane.b32.xlu0 %v1754, 3
        %v1766 = vpop.permute.xlu0 %1765
        %v1767 = vld [vmem:[%s6] sm:$0xff]
        %v1768 = vld [vmem:[%s6 + $0x8] sm:$0xff]
        %1769 = vrot.lane.b32.xlu0 0.0, 2
        %v1770 = vpop.permute.xlu0 %1769
        %1771 = vrot.lane.b32.xlu0 %v1376, 2
        %v1772 = vpop.permute.xlu0 %1771
        %1773 = vrot.lane.b32.xlu0 %v1377, 2
        %v1774 = vpop.permute.xlu0 %1773
        %1775 = vrot.lane.b32.xlu0 %v1749, 2
        %v1776 = vpop.permute.xlu0 %1775
        %1777 = vrot.lane.b32.xlu0 %v1754, 2
        %v1778 = vpop.permute.xlu0 %1777
        %s1779 = scalar_lea.vmem %s6, 16
        %v1780 = vld [vmem:[%s1779] sm:$0xff]
        %v1781 = vld [vmem:[%s1779 + $0x8] sm:$0xff]
        %vm1782 = vcmask 457728
        %v1784 = vsel %vm1782, %v1780, 0
        %v1787 = vsel %vm1782, %v1781, 0
        %1789 = vmatprep.subr.mxu0 0.0
        %1790 = vmatpush1.msra.mxu0 %v1770
        %1791 = vmatprep.subr.mxu0 0.0
        %1792 = vmatpush1.msra.mxu0 %v1772
        %1793 = vmatprep.subr.mxu0 0.0
        %1794 = vmatpush1.msra.mxu0 %v1774
        %1795 = vmatprep.subr.mxu0 0.0
        %1796 = vmatpush1.msra.mxu0 %v1770
        %1797 = vmatprep.subr.mxu0 0.0
        %1798 = vmatpush1.msra.mxu0 %v1776
        %1799 = vmatprep.subr.mxu0 0.0
        %1800 = vmatpush1.msra.mxu0 %v1778
        %1801 = vmatprep.subr.mxu0 0.0
        %1802 = vmatpush1.msra.mxu0 %v1770
        %1803 = vmatprep.subr.mxu0 0.0
        %1804 = vmatpush1.msra.mxu0 0.0
        %1805 = vmatprep.subr.mxu0 0.0
        %1806 = vmatpush1.msra.mxu0 0.0
        %1807 = vmatprep.subr.mxu0 0.0
        %1808 = vmatpush1.msra.mxu0 0.0
        %1809 = vmatprep.subr.mxu0 0.0
        %1810 = vmatpush1.msra.mxu0 0.0
        %1811 = vmatprep.subr.mxu0 0.0
        %1812 = vmatpush1.msra.mxu0 0.0
        %1813 = vmatprep.subr.mxu0 0.0
        %1814 = vmatpush1.msra.mxu0 0.0
        %1815 = vmatprep.subr.mxu0 0.0
        %1816 = vmatpush1.msra.mxu0 0.0
        %1817 = vmatprep.subr.mxu0 0.0
        %1818 = vmatpush1.msra.mxu0 0.0
        %1819 = vmatprep.subr.mxu0 0.0
        %1820 = vmatpush1.msra.mxu0 0.0
        %1821 = vmatprep.subr.mxu0 0.0
        %1822 = vmatpush1.msra.mxu0 0.0
        %1823 = vmatprep.subr.mxu0 0.0
        %1824 = vmatpush1.msra.mxu0 0.0
        %1825 = vmatprep.subr.mxu0 0.0
        %1826 = vmatpush1.msra.mxu0 0.0
        %1827 = vmatprep.subr.mxu0 0.0
        %1828 = vmatpush1.msra.mxu0 0.0
        %1829 = vmatprep.subr.mxu0 0.0
        %1830 = vmatpush1.msra.mxu0 0.0
        %1831 = vmatprep.subr.mxu0 0.0
        %1832 = vmatpush1.msra.mxu0 0.0
        %1833 = vmatprep.subr.mxu0 0.0
        %1834 = vmatpush1.msra.mxu0 0.0
        %1835 = vmatprep.subr.mxu0 0.0
        %1836 = vmatpush1.msra.mxu0 0.0
        %1837 = vmatprep.subr.mxu0 0.0
        %1838 = vmatpush1.msra.mxu0 0.0
        %1839 = vmatprep.subr.mxu0 0.0
        %1840 = vmatpush1.msra.mxu0 0.0
        %1841 = vmatprep.subr.mxu0 0.0
        %1842 = vmatpush1.msra.mxu0 0.0
        %1843 = vmatprep.subr.mxu0 0.0
        %1844 = vmatpush1.msra.mxu0 0.0
        %1845 = vmatprep.subr.mxu0 0.0
        %1846 = vmatpush1.msra.mxu0 0.0
        %1847 = vmatprep.subr.mxu0 0.0
        %1848 = vmatpush1.msra.mxu0 0.0
        %1849 = vmatprep.subr.mxu0 0.0
        %1850 = vmatpush1.msra.mxu0 0.0
        %1851 = vmatprep.subr.mxu0 0.0
        %1852 = vmatpush1.msra.mxu0 0.0
        %1853 = vmatprep.mubr.f32.mxu0 0.0
        %1854 = vmatmul.mubr.f32.gmra.mrb[0].mxu0 %v1784
        %v1855 = vpop.f32.mrb[0].mxu0
        %v1856 = vadd.f32 0.0, %v1855
        %v1857 = vpop.f32.mrb[0].mxu0
        %1858 = vmatprep.mubr.f32.mxu0 0.0
        %1859 = vmatmul.mubr.f32.gmra.mrb[0].mxu0 %v1787
        %v1860 = vpop.f32.mrb[0].mxu0
        %v1861 = vadd.f32 0.0, %v1860
        %v1862 = vpop.f32.mrb[0].mxu0
        %1863 = vdwg.mxu0
        %v1865 = vsel %vm1782, %v1767, 0
        %v1868 = vsel %vm1782, %v1768, 0
        %1870 = vmatprep.subr.mxu0 0.0
        %1871 = vmatpush1.msra.mxu0 %v1758
        %1872 = vmatprep.subr.mxu0 0.0
        %1873 = vmatpush1.msra.mxu0 %v1760
        %1874 = vmatprep.subr.mxu0 0.0
        %1875 = vmatpush1.msra.mxu0 %v1762
        %1876 = vmatprep.subr.mxu0 0.0
        %1877 = vmatpush1.msra.mxu0 %v1758
        %1878 = vmatprep.subr.mxu0 0.0
        %1879 = vmatpush1.msra.mxu0 %v1764
        %1880 = vmatprep.subr.mxu0 0.0
        %1881 = vmatpush1.msra.mxu0 %v1766
        %1882 = vmatprep.subr.mxu0 0.0
        %1883 = vmatpush1.msra.mxu0 %v1758
        %1884 = vmatprep.subr.mxu0 0.0
        %1885 = vmatpush1.msra.mxu0 0.0
        %1886 = vmatprep.subr.mxu0 0.0
        %1887 = vmatpush1.msra.mxu0 0.0
        %1888 = vmatprep.subr.mxu0 0.0
        %1889 = vmatpush1.msra.mxu0 0.0
        %1890 = vmatprep.subr.mxu0 0.0
        %1891 = vmatpush1.msra.mxu0 0.0
        %1892 = vmatprep.subr.mxu0 0.0
        %1893 = vmatpush1.msra.mxu0 0.0
        %1894 = vmatprep.subr.mxu0 0.0
        %1895 = vmatpush1.msra.mxu0 0.0
        %1896 = vmatprep.subr.mxu0 0.0
        %1897 = vmatpush1.msra.mxu0 0.0
        %1898 = vmatprep.subr.mxu0 0.0
        %1899 = vmatpush1.msra.mxu0 0.0
        %1900 = vmatprep.subr.mxu0 0.0
        %1901 = vmatpush1.msra.mxu0 0.0
        %1902 = vmatprep.subr.mxu0 0.0
        %1903 = vmatpush1.msra.mxu0 0.0
        %1904 = vmatprep.subr.mxu0 0.0
        %1905 = vmatpush1.msra.mxu0 0.0
        %1906 = vmatprep.subr.mxu0 0.0
        %1907 = vmatpush1.msra.mxu0 0.0
        %1908 = vmatprep.subr.mxu0 0.0
        %1909 = vmatpush1.msra.mxu0 0.0
        %1910 = vmatprep.subr.mxu0 0.0
        %1911 = vmatpush1.msra.mxu0 0.0
        %1912 = vmatprep.subr.mxu0 0.0
        %1913 = vmatpush1.msra.mxu0 0.0
        %1914 = vmatprep.subr.mxu0 0.0
        %1915 = vmatpush1.msra.mxu0 0.0
        %1916 = vmatprep.subr.mxu0 0.0
        %1917 = vmatpush1.msra.mxu0 0.0
        %1918 = vmatprep.subr.mxu0 0.0
        %1919 = vmatpush1.msra.mxu0 0.0
        %1920 = vmatprep.subr.mxu0 0.0
        %1921 = vmatpush1.msra.mxu0 0.0
        %1922 = vmatprep.subr.mxu0 0.0
        %1923 = vmatpush1.msra.mxu0 0.0
        %1924 = vmatprep.subr.mxu0 0.0
        %1925 = vmatpush1.msra.mxu0 0.0
        %1926 = vmatprep.subr.mxu0 0.0
        %1927 = vmatpush1.msra.mxu0 0.0
        %1928 = vmatprep.subr.mxu0 0.0
        %1929 = vmatpush1.msra.mxu0 0.0
        %1930 = vmatprep.subr.mxu0 0.0
        %1931 = vmatpush1.msra.mxu0 0.0
        %1932 = vmatprep.subr.mxu0 0.0
        %1933 = vmatpush1.msra.mxu0 0.0
        %1934 = vmatprep.mubr.f32.mxu0 0.0
        %1935 = vmatmul.mubr.f32.gmra.mrb[0].mxu0 %v1865
        %v1936 = vpop.f32.mrb[0].mxu0
        %v1937 = vadd.f32 %v1856, %v1936
        %v1938 = vpop.f32.mrb[0].mxu0
        %1939 = vmatprep.mubr.f32.mxu0 0.0
        %1940 = vmatmul.mubr.f32.gmra.mrb[0].mxu0 %v1868
        %v1941 = vpop.f32.mrb[0].mxu0
        %v1942 = vadd.f32 %v1861, %v1941
        %v1943 = vpop.f32.mrb[0].mxu0
        %1944 = vdwg.mxu0
        %1945 = vrot.lane.b32.xlu0 0.0, 1
        %v1946 = vpop.permute.xlu0 %1945
        %1947 = vrot.lane.b32.xlu0 %v1376, 1
        %v1948 = vpop.permute.xlu0 %1947
        %1949 = vrot.lane.b32.xlu0 %v1377, 1
        %v1950 = vpop.permute.xlu0 %1949
        %1951 = vrot.lane.b32.xlu0 %v1749, 1
        %v1952 = vpop.permute.xlu0 %1951
        %1953 = vrot.lane.b32.xlu0 %v1754, 1
        %v1954 = vpop.permute.xlu0 %1953
        %s1955 = scalar_lea.vmem %s6, 32
        %v1956 = vld [vmem:[%s1955] sm:$0xff]
        %v1957 = vld [vmem:[%s1955 + $0x8] sm:$0xff]
        %v1959 = vsel %vm1782, %v1956, 0
        %v1962 = vsel %vm1782, %v1957, 0
        %1964 = vmatprep.subr.mxu0 0.0
        %1965 = vmatpush1.msra.mxu0 %v1946
        %1966 = vmatprep.subr.mxu0 0.0
        %1967 = vmatpush1.msra.mxu0 %v1948
        %1968 = vmatprep.subr.mxu0 0.0
        %1969 = vmatpush1.msra.mxu0 %v1950
        %1970 = vmatprep.subr.mxu0 0.0
        %1971 = vmatpush1.msra.mxu0 %v1946
        %1972 = vmatprep.subr.mxu0 0.0
        %1973 = vmatpush1.msra.mxu0 %v1952
        %1974 = vmatprep.subr.mxu0 0.0
        %1975 = vmatpush1.msra.mxu0 %v1954
        %1976 = vmatprep.subr.mxu0 0.0
        %1977 = vmatpush1.msra.mxu0 %v1946
        %1978 = vmatprep.subr.mxu0 0.0
        %1979 = vmatpush1.msra.mxu0 0.0
        %1980 = vmatprep.subr.mxu0 0.0
        %1981 = vmatpush1.msra.mxu0 0.0
        %1982 = vmatprep.subr.mxu0 0.0
        %1983 = vmatpush1.msra.mxu0 0.0
        %1984 = vmatprep.subr.mxu0 0.0
        %1985 = vmatpush1.msra.mxu0 0.0
        %1986 = vmatprep.subr.mxu0 0.0
        %1987 = vmatpush1.msra.mxu0 0.0
        %1988 = vmatprep.subr.mxu0 0.0
        %1989 = vmatpush1.msra.mxu0 0.0
        %1990 = vmatprep.subr.mxu0 0.0
        %1991 = vmatpush1.msra.mxu0 0.0
        %1992 = vmatprep.subr.mxu0 0.0
        %1993 = vmatpush1.msra.mxu0 0.0
        %1994 = vmatprep.subr.mxu0 0.0
        %1995 = vmatpush1.msra.mxu0 0.0
        %1996 = vmatprep.subr.mxu0 0.0
        %1997 = vmatpush1.msra.mxu0 0.0
        %1998 = vmatprep.subr.mxu0 0.0
        %1999 = vmatpush1.msra.mxu0 0.0
        %2000 = vmatprep.subr.mxu0 0.0
        %2001 = vmatpush1.msra.mxu0 0.0
        %2002 = vmatprep.subr.mxu0 0.0
        %2003 = vmatpush1.msra.mxu0 0.0
        %2004 = vmatprep.subr.mxu0 0.0
        %2005 = vmatpush1.msra.mxu0 0.0
        %2006 = vmatprep.subr.mxu0 0.0
        %2007 = vmatpush1.msra.mxu0 0.0
        %2008 = vmatprep.subr.mxu0 0.0
        %2009 = vmatpush1.msra.mxu0 0.0
        %2010 = vmatprep.subr.mxu0 0.0
        %2011 = vmatpush1.msra.mxu0 0.0
        %2012 = vmatprep.subr.mxu0 0.0
        %2013 = vmatpush1.msra.mxu0 0.0
        %2014 = vmatprep.subr.mxu0 0.0
        %2015 = vmatpush1.msra.mxu0 0.0
        %2016 = vmatprep.subr.mxu0 0.0
        %2017 = vmatpush1.msra.mxu0 0.0
        %2018 = vmatprep.subr.mxu0 0.0
        %2019 = vmatpush1.msra.mxu0 0.0
        %2020 = vmatprep.subr.mxu0 0.0
        %2021 = vmatpush1.msra.mxu0 0.0
        %2022 = vmatprep.subr.mxu0 0.0
        %2023 = vmatpush1.msra.mxu0 0.0
        %2024 = vmatprep.subr.mxu0 0.0
        %2025 = vmatpush1.msra.mxu0 0.0
        %2026 = vmatprep.subr.mxu0 0.0
        %2027 = vmatpush1.msra.mxu0 0.0
        %2028 = vmatprep.mubr.f32.mxu0 0.0
        %2029 = vmatmul.mubr.f32.gmra.mrb[0].mxu0 %v1959
        %v2030 = vpop.f32.mrb[0].mxu0
        %v2031 = vadd.f32 0.0, %v2030
        %v2032 = vpop.f32.mrb[0].mxu0
        %2033 = vmatprep.mubr.f32.mxu0 0.0
        %2034 = vmatmul.mubr.f32.gmra.mrb[0].mxu0 %v1962
        %v2035 = vpop.f32.mrb[0].mxu0
        %v2036 = vadd.f32 0.0, %v2035
        %v2037 = vpop.f32.mrb[0].mxu0
        %2038 = vdwg.mxu0
        %v2039 = vadd.f32 %v1937, %v2031
        %v2040 = vadd.f32 %v1942, %v2036
        %s2041 = scalar_lea.vmem %s6, 48
        %v2042 = vld [vmem:[%s2041] sm:$0xff]
        %v2043 = vld [vmem:[%s2041 + $0x8] sm:$0xff]
        %v2045 = vsel %vm1782, %v2042, 0
        %v2048 = vsel %vm1782, %v2043, 0
        %2050 = vmatprep.subr.mxu0 0.0
        %2051 = vmatpush1.msra.mxu0 0.0
        %2052 = vmatprep.subr.mxu0 0.0
        %2053 = vmatpush1.msra.mxu0 %v1376
        %2054 = vmatprep.subr.mxu0 0.0
        %2055 = vmatpush1.msra.mxu0 %v1377
        %2056 = vmatprep.subr.mxu0 0.0
        %2057 = vmatpush1.msra.mxu0 0.0
        %2058 = vmatprep.subr.mxu0 0.0
        %2059 = vmatpush1.msra.mxu0 %v1749
        %2060 = vmatprep.subr.mxu0 0.0
        %2061 = vmatpush1.msra.mxu0 %v1754
        %2062 = vmatprep.subr.mxu0 0.0
        %2063 = vmatpush1.msra.mxu0 0.0
        %2064 = vmatprep.subr.mxu0 0.0
        %2065 = vmatpush1.msra.mxu0 0.0
        %2066 = vmatprep.subr.mxu0 0.0
        %2067 = vmatpush1.msra.mxu0 0.0
        %2068 = vmatprep.subr.mxu0 0.0
        %2069 = vmatpush1.msra.mxu0 0.0
        %2070 = vmatprep.subr.mxu0 0.0
        %2071 = vmatpush1.msra.mxu0 0.0
        %2072 = vmatprep.subr.mxu0 0.0
        %2073 = vmatpush1.msra.mxu0 0.0
        %2074 = vmatprep.subr.mxu0 0.0
        %2075 = vmatpush1.msra.mxu0 0.0
        %2076 = vmatprep.subr.mxu0 0.0
        %2077 = vmatpush1.msra.mxu0 0.0
        %2078 = vmatprep.subr.mxu0 0.0
        %2079 = vmatpush1.msra.mxu0 0.0
        %2080 = vmatprep.subr.mxu0 0.0
        %2081 = vmatpush1.msra.mxu0 0.0
        %2082 = vmatprep.subr.mxu0 0.0
        %2083 = vmatpush1.msra.mxu0 0.0
        %2084 = vmatprep.subr.mxu0 0.0
        %2085 = vmatpush1.msra.mxu0 0.0
        %2086 = vmatprep.subr.mxu0 0.0
        %2087 = vmatpush1.msra.mxu0 0.0
        %2088 = vmatprep.subr.mxu0 0.0
        %2089 = vmatpush1.msra.mxu0 0.0
        %2090 = vmatprep.subr.mxu0 0.0
        %2091 = vmatpush1.msra.mxu0 0.0
        %2092 = vmatprep.subr.mxu0 0.0
        %2093 = vmatpush1.msra.mxu0 0.0
        %2094 = vmatprep.subr.mxu0 0.0
        %2095 = vmatpush1.msra.mxu0 0.0
        %2096 = vmatprep.subr.mxu0 0.0
        %2097 = vmatpush1.msra.mxu0 0.0
        %2098 = vmatprep.subr.mxu0 0.0
        %2099 = vmatpush1.msra.mxu0 0.0
        %2100 = vmatprep.subr.mxu0 0.0
        %2101 = vmatpush1.msra.mxu0 0.0
        %2102 = vmatprep.subr.mxu0 0.0
        %2103 = vmatpush1.msra.mxu0 0.0
        %2104 = vmatprep.subr.mxu0 0.0
        %2105 = vmatpush1.msra.mxu0 0.0
        %2106 = vmatprep.subr.mxu0 0.0
        %2107 = vmatpush1.msra.mxu0 0.0
        %2108 = vmatprep.subr.mxu0 0.0
        %2109 = vmatpush1.msra.mxu0 0.0
        %2110 = vmatprep.subr.mxu0 0.0
        %2111 = vmatpush1.msra.mxu0 0.0
        %2112 = vmatprep.subr.mxu0 0.0
        %2113 = vmatpush1.msra.mxu0 0.0
        %2114 = vmatprep.mubr.f32.mxu0 0.0
        %2115 = vmatmul.mubr.f32.gmra.mrb[0].mxu0 %v2045
        %v2116 = vpop.f32.mrb[0].mxu0
        %v2117 = vadd.f32 0.0, %v2116
        %v2118 = vpop.f32.mrb[0].mxu0
        %2119 = vmatprep.mubr.f32.mxu0 0.0
        %2120 = vmatmul.mubr.f32.gmra.mrb[0].mxu0 %v2048
        %v2121 = vpop.f32.mrb[0].mxu0
        %v2122 = vadd.f32 0.0, %v2121
        %v2123 = vpop.f32.mrb[0].mxu0
        %2124 = vdwg.mxu0
        %v2125 = vadd.f32 %v2039, %v2117
        %v2126 = vadd.f32 %v2040, %v2122
        %2127 = vrot.lane.b32.xlu0 0.0, 127
        %v2128 = vpop.permute.xlu0 %2127
        %2129 = vrot.lane.b32.xlu0 %v1376, 127
        %v2130 = vpop.permute.xlu0 %2129
        %2131 = vrot.lane.b32.xlu0 %v1377, 127
        %v2132 = vpop.permute.xlu0 %2131
        %2133 = vrot.lane.b32.xlu0 %v1749, 127
        %v2134 = vpop.permute.xlu0 %2133
        %2135 = vrot.lane.b32.xlu0 %v1754, 127
        %v2136 = vpop.permute.xlu0 %2135
        %s2137 = scalar_lea.vmem %s6, 64
        %v2138 = vld [vmem:[%s2137] sm:$0xff]
        %v2139 = vld [vmem:[%s2137 + $0x8] sm:$0xff]
        %v2141 = vsel %vm1782, %v2138, 0
        %v2144 = vsel %vm1782, %v2139, 0
        %2146 = vmatprep.subr.mxu0 0.0
        %2147 = vmatpush1.msra.mxu0 %v2128
        %2148 = vmatprep.subr.mxu0 0.0
        %2149 = vmatpush1.msra.mxu0 %v2130
        %2150 = vmatprep.subr.mxu0 0.0
        %2151 = vmatpush1.msra.mxu0 %v2132
        %2152 = vmatprep.subr.mxu0 0.0
        %2153 = vmatpush1.msra.mxu0 %v2128
        %2154 = vmatprep.subr.mxu0 0.0
        %2155 = vmatpush1.msra.mxu0 %v2134
        %2156 = vmatprep.subr.mxu0 0.0
        %2157 = vmatpush1.msra.mxu0 %v2136
        %2158 = vmatprep.subr.mxu0 0.0
        %2159 = vmatpush1.msra.mxu0 %v2128
        %2160 = vmatprep.subr.mxu0 0.0
        %2161 = vmatpush1.msra.mxu0 0.0
        %2162 = vmatprep.subr.mxu0 0.0
        %2163 = vmatpush1.msra.mxu0 0.0
        %2164 = vmatprep.subr.mxu0 0.0
        %2165 = vmatpush1.msra.mxu0 0.0
        %2166 = vmatprep.subr.mxu0 0.0
        %2167 = vmatpush1.msra.mxu0 0.0
        %2168 = vmatprep.subr.mxu0 0.0
        %2169 = vmatpush1.msra.mxu0 0.0
        %2170 = vmatprep.subr.mxu0 0.0
        %2171 = vmatpush1.msra.mxu0 0.0
        %2172 = vmatprep.subr.mxu0 0.0
        %2173 = vmatpush1.msra.mxu0 0.0
        %2174 = vmatprep.subr.mxu0 0.0
        %2175 = vmatpush1.msra.mxu0 0.0
        %2176 = vmatprep.subr.mxu0 0.0
        %2177 = vmatpush1.msra.mxu0 0.0
        %2178 = vmatprep.subr.mxu0 0.0
        %2179 = vmatpush1.msra.mxu0 0.0
        %2180 = vmatprep.subr.mxu0 0.0
        %2181 = vmatpush1.msra.mxu0 0.0
        %2182 = vmatprep.subr.mxu0 0.0
        %2183 = vmatpush1.msra.mxu0 0.0
        %2184 = vmatprep.subr.mxu0 0.0
        %2185 = vmatpush1.msra.mxu0 0.0
        %2186 = vmatprep.subr.mxu0 0.0
        %2187 = vmatpush1.msra.mxu0 0.0
        %2188 = vmatprep.subr.mxu0 0.0
        %2189 = vmatpush1.msra.mxu0 0.0
        %2190 = vmatprep.subr.mxu0 0.0
        %2191 = vmatpush1.msra.mxu0 0.0
        %2192 = vmatprep.subr.mxu0 0.0
        %2193 = vmatpush1.msra.mxu0 0.0
        %2194 = vmatprep.subr.mxu0 0.0
        %2195 = vmatpush1.msra.mxu0 0.0
        %2196 = vmatprep.subr.mxu0 0.0
        %2197 = vmatpush1.msra.mxu0 0.0
        %2198 = vmatprep.subr.mxu0 0.0
        %2199 = vmatpush1.msra.mxu0 0.0
        %2200 = vmatprep.subr.mxu0 0.0
        %2201 = vmatpush1.msra.mxu0 0.0
        %2202 = vmatprep.subr.mxu0 0.0
        %2203 = vmatpush1.msra.mxu0 0.0
        %2204 = vmatprep.subr.mxu0 0.0
        %2205 = vmatpush1.msra.mxu0 0.0
        %2206 = vmatprep.subr.mxu0 0.0
        %2207 = vmatpush1.msra.mxu0 0.0
        %2208 = vmatprep.subr.mxu0 0.0
        %2209 = vmatpush1.msra.mxu0 0.0
        %2210 = vmatprep.mubr.f32.mxu0 0.0
        %2211 = vmatmul.mubr.f32.gmra.mrb[0].mxu0 %v2141
        %v2212 = vpop.f32.mrb[0].mxu0
        %v2213 = vadd.f32 0.0, %v2212
        %v2214 = vpop.f32.mrb[0].mxu0
        %2215 = vmatprep.mubr.f32.mxu0 0.0
        %2216 = vmatmul.mubr.f32.gmra.mrb[0].mxu0 %v2144
        %v2217 = vpop.f32.mrb[0].mxu0
        %v2218 = vadd.f32 0.0, %v2217
        %v2219 = vpop.f32.mrb[0].mxu0
        %2220 = vdwg.mxu0
        %v2221 = vadd.f32 %v2125, %v2213
        %v2222 = vadd.f32 %v2126, %v2218
        %2223 = vrot.lane.b32.xlu0 0.0, 126
        %v2224 = vpop.permute.xlu0 %2223
        %2225 = vrot.lane.b32.xlu0 %v1376, 126
        %v2226 = vpop.permute.xlu0 %2225
        %2227 = vrot.lane.b32.xlu0 %v1377, 126
        %v2228 = vpop.permute.xlu0 %2227
        %2229 = vrot.lane.b32.xlu0 %v1749, 126
        %v2230 = vpop.permute.xlu0 %2229
        %2231 = vrot.lane.b32.xlu0 %v1754, 126
        %v2232 = vpop.permute.xlu0 %2231
        %s2233 = scalar_lea.vmem %s6, 80
        %v2234 = vld [vmem:[%s2233] sm:$0xff]
        %v2235 = vld [vmem:[%s2233 + $0x8] sm:$0xff]
        %v2237 = vsel %vm1782, %v2234, 0
        %v2240 = vsel %vm1782, %v2235, 0
        %2242 = vmatprep.subr.mxu0 0.0
        %2243 = vmatpush1.msra.mxu0 %v2224
        %2244 = vmatprep.subr.mxu0 0.0
        %2245 = vmatpush1.msra.mxu0 %v2226
        %2246 = vmatprep.subr.mxu0 0.0
        %2247 = vmatpush1.msra.mxu0 %v2228
        %2248 = vmatprep.subr.mxu0 0.0
        %2249 = vmatpush1.msra.mxu0 %v2224
        %2250 = vmatprep.subr.mxu0 0.0
        %2251 = vmatpush1.msra.mxu0 %v2230
        %2252 = vmatprep.subr.mxu0 0.0
        %2253 = vmatpush1.msra.mxu0 %v2232
        %2254 = vmatprep.subr.mxu0 0.0
        %2255 = vmatpush1.msra.mxu0 %v2224
        %2256 = vmatprep.subr.mxu0 0.0
        %2257 = vmatpush1.msra.mxu0 0.0
        %2258 = vmatprep.subr.mxu0 0.0
        %2259 = vmatpush1.msra.mxu0 0.0
        %2260 = vmatprep.subr.mxu0 0.0
        %2261 = vmatpush1.msra.mxu0 0.0
        %2262 = vmatprep.subr.mxu0 0.0
        %2263 = vmatpush1.msra.mxu0 0.0
        %2264 = vmatprep.subr.mxu0 0.0
        %2265 = vmatpush1.msra.mxu0 0.0
        %2266 = vmatprep.subr.mxu0 0.0
        %2267 = vmatpush1.msra.mxu0 0.0
        %2268 = vmatprep.subr.mxu0 0.0
        %2269 = vmatpush1.msra.mxu0 0.0
        %2270 = vmatprep.subr.mxu0 0.0
        %2271 = vmatpush1.msra.mxu0 0.0
        %2272 = vmatprep.subr.mxu0 0.0
        %2273 = vmatpush1.msra.mxu0 0.0
        %2274 = vmatprep.subr.mxu0 0.0
        %2275 = vmatpush1.msra.mxu0 0.0
        %2276 = vmatprep.subr.mxu0 0.0
        %2277 = vmatpush1.msra.mxu0 0.0
        %2278 = vmatprep.subr.mxu0 0.0
        %2279 = vmatpush1.msra.mxu0 0.0
        %2280 = vmatprep.subr.mxu0 0.0
        %2281 = vmatpush1.msra.mxu0 0.0
        %2282 = vmatprep.subr.mxu0 0.0
        %2283 = vmatpush1.msra.mxu0 0.0
        %2284 = vmatprep.subr.mxu0 0.0
        %2285 = vmatpush1.msra.mxu0 0.0
        %2286 = vmatprep.subr.mxu0 0.0
        %2287 = vmatpush1.msra.mxu0 0.0
        %2288 = vmatprep.subr.mxu0 0.0
        %2289 = vmatpush1.msra.mxu0 0.0
        %2290 = vmatprep.subr.mxu0 0.0
        %2291 = vmatpush1.msra.mxu0 0.0
        %2292 = vmatprep.subr.mxu0 0.0
        %2293 = vmatpush1.msra.mxu0 0.0
        %2294 = vmatprep.subr.mxu0 0.0
        %2295 = vmatpush1.msra.mxu0 0.0
        %2296 = vmatprep.subr.mxu0 0.0
        %2297 = vmatpush1.msra.mxu0 0.0
        %2298 = vmatprep.subr.mxu0 0.0
        %2299 = vmatpush1.msra.mxu0 0.0
        %2300 = vmatprep.subr.mxu0 0.0
        %2301 = vmatpush1.msra.mxu0 0.0
        %2302 = vmatprep.subr.mxu0 0.0
        %2303 = vmatpush1.msra.mxu0 0.0
        %2304 = vmatprep.subr.mxu0 0.0
        %2305 = vmatpush1.msra.mxu0 0.0
        %2306 = vmatprep.mubr.f32.mxu0 0.0
        %2307 = vmatmul.mubr.f32.gmra.mrb[0].mxu0 %v2237
        %v2308 = vpop.f32.mrb[0].mxu0
        %v2309 = vadd.f32 0.0, %v2308
        %v2310 = vpop.f32.mrb[0].mxu0
        %2311 = vmatprep.mubr.f32.mxu0 0.0
        %2312 = vmatmul.mubr.f32.gmra.mrb[0].mxu0 %v2240
        %v2313 = vpop.f32.mrb[0].mxu0
        %v2314 = vadd.f32 0.0, %v2313
        %v2315 = vpop.f32.mrb[0].mxu0
        %2316 = vdwg.mxu0
        %v2317 = vadd.f32 %v2221, %v2309
        %v2318 = vadd.f32 %v2222, %v2314
        %2319 = vrot.lane.b32.xlu0 0.0, 125
        %v2320 = vpop.permute.xlu0 %2319
        %2321 = vrot.lane.b32.xlu0 %v1376, 125
        %v2322 = vpop.permute.xlu0 %2321
        %2323 = vrot.lane.b32.xlu0 %v1377, 125
        %v2324 = vpop.permute.xlu0 %2323
        %2325 = vrot.lane.b32.xlu0 %v1749, 125
        %v2326 = vpop.permute.xlu0 %2325
        %2327 = vrot.lane.b32.xlu0 %v1754, 125
        %v2328 = vpop.permute.xlu0 %2327
        %s2329 = scalar_lea.vmem %s6, 96
        %v2330 = vld [vmem:[%s2329] sm:$0xff]
        %v2331 = vld [vmem:[%s2329 + $0x8] sm:$0xff]
        %v2333 = vsel %vm1782, %v2330, 0
        %v2336 = vsel %vm1782, %v2331, 0
        %2338 = vmatprep.subr.mxu0 0.0
        %2339 = vmatpush1.msra.mxu0 %v2320
        %2340 = vmatprep.subr.mxu0 0.0
        %2341 = vmatpush1.msra.mxu0 %v2322
        %2342 = vmatprep.subr.mxu0 0.0
        %2343 = vmatpush1.msra.mxu0 %v2324
        %2344 = vmatprep.subr.mxu0 0.0
        %2345 = vmatpush1.msra.mxu0 %v2320
        %2346 = vmatprep.subr.mxu0 0.0
        %2347 = vmatpush1.msra.mxu0 %v2326
        %2348 = vmatprep.subr.mxu0 0.0
        %2349 = vmatpush1.msra.mxu0 %v2328
        %2350 = vmatprep.subr.mxu0 0.0
        %2351 = vmatpush1.msra.mxu0 %v2320
        %2352 = vmatprep.subr.mxu0 0.0
        %2353 = vmatpush1.msra.mxu0 0.0
        %2354 = vmatprep.subr.mxu0 0.0
        %2355 = vmatpush1.msra.mxu0 0.0
        %2356 = vmatprep.subr.mxu0 0.0
        %2357 = vmatpush1.msra.mxu0 0.0
        %2358 = vmatprep.subr.mxu0 0.0
        %2359 = vmatpush1.msra.mxu0 0.0
        %2360 = vmatprep.subr.mxu0 0.0
        %2361 = vmatpush1.msra.mxu0 0.0
        %2362 = vmatprep.subr.mxu0 0.0
        %2363 = vmatpush1.msra.mxu0 0.0
        %2364 = vmatprep.subr.mxu0 0.0
        %2365 = vmatpush1.msra.mxu0 0.0
        %2366 = vmatprep.subr.mxu0 0.0
        %2367 = vmatpush1.msra.mxu0 0.0
        %2368 = vmatprep.subr.mxu0 0.0
        %2369 = vmatpush1.msra.mxu0 0.0
        %2370 = vmatprep.subr.mxu0 0.0
        %2371 = vmatpush1.msra.mxu0 0.0
        %2372 = vmatprep.subr.mxu0 0.0
        %2373 = vmatpush1.msra.mxu0 0.0
        %2374 = vmatprep.subr.mxu0 0.0
        %2375 = vmatpush1.msra.mxu0 0.0
        %2376 = vmatprep.subr.mxu0 0.0
        %2377 = vmatpush1.msra.mxu0 0.0
        %2378 = vmatprep.subr.mxu0 0.0
        %2379 = vmatpush1.msra.mxu0 0.0
        %2380 = vmatprep.subr.mxu0 0.0
        %2381 = vmatpush1.msra.mxu0 0.0
        %2382 = vmatprep.subr.mxu0 0.0
        %2383 = vmatpush1.msra.mxu0 0.0
        %2384 = vmatprep.subr.mxu0 0.0
        %2385 = vmatpush1.msra.mxu0 0.0
        %2386 = vmatprep.subr.mxu0 0.0
        %2387 = vmatpush1.msra.mxu0 0.0
        %2388 = vmatprep.subr.mxu0 0.0
        %2389 = vmatpush1.msra.mxu0 0.0
        %2390 = vmatprep.subr.mxu0 0.0
        %2391 = vmatpush1.msra.mxu0 0.0
        %2392 = vmatprep.subr.mxu0 0.0
        %2393 = vmatpush1.msra.mxu0 0.0
        %2394 = vmatprep.subr.mxu0 0.0
        %2395 = vmatpush1.msra.mxu0 0.0
        %2396 = vmatprep.subr.mxu0 0.0
        %2397 = vmatpush1.msra.mxu0 0.0
        %2398 = vmatprep.subr.mxu0 0.0
        %2399 = vmatpush1.msra.mxu0 0.0
        %2400 = vmatprep.subr.mxu0 0.0
        %2401 = vmatpush1.msra.mxu0 0.0
        %2402 = vmatprep.mubr.f32.mxu0 0.0
        %2403 = vmatmul.mubr.f32.gmra.mrb[0].mxu0 %v2333
        %v2404 = vpop.f32.mrb[0].mxu0
        %v2405 = vadd.f32 0.0, %v2404
        %v2406 = vpop.f32.mrb[0].mxu0
        %2407 = vmatprep.mubr.f32.mxu0 0.0
        %2408 = vmatmul.mubr.f32.gmra.mrb[0].mxu0 %v2336
        %v2409 = vpop.f32.mrb[0].mxu0
        %v2410 = vadd.f32 0.0, %v2409
        %v2411 = vpop.f32.mrb[0].mxu0
        %2412 = vdwg.mxu0
        %v2413 = vadd.f32 %v2317, %v2405
        %v2414 = vadd.f32 %v2318, %v2410
        %v2415 = vxor.u32 %v2413, 2147483648
        %v2416 = vxor.u32 %v2414, 2147483648
        %v2417 = vmul.f32 %v2415, 1.442695
        %v2418 = vpow.pop %v2417
        %v2419 = vmul.f32 %v2416, 1.442695
        %v2420 = vpow.pop %v2419
        %v2421 = vadd.f32 %v2418, 1.0
        %v2422 = vadd.f32 %v2420, 1.0
        %v2423 = vrcp.pop %v2421
        %v2424 = vmul.f32 1.0, %v2423
        %v2425 = vrcp.pop %v2422
        %v2426 = vmul.f32 1.0, %v2425
        %2427 = vmatprep.subr.mxu0 0.0
        %2428 = vmatpush1.xpose.msra.mxu0 %v381
        %2429 = vmatprep.subr.mxu0 0.0
        %2430 = vmatpush1.xpose.msra.mxu0 %v382
        %2431 = vmatprep.subr.mxu0 0.0
        %2432 = vmatpush1.xpose.msra.mxu0 %v383
        %2433 = vmatprep.subr.mxu0 0.0
        %2434 = vmatpush1.xpose.msra.mxu0 %v384
        %2435 = vmatprep.subr.mxu0 0.0
        %2436 = vmatpush1.xpose.msra.mxu0 %v385
        %2437 = vmatprep.subr.mxu0 0.0
        %2438 = vmatpush1.xpose.msra.mxu0 %v386
        %2439 = vmatprep.subr.mxu0 0.0
        %2440 = vmatpush1.xpose.msra.mxu0 %v387
        %2441 = vmatprep.subr.mxu0 0.0
        %2442 = vmatpush1.xpose.msra.mxu0 %v388
        %2443 = vmatprep.subr.mxu0 0.0
        %2444 = vmatpush1.xpose.msra.mxu0 %v389
        %2445 = vmatprep.subr.mxu0 0.0
        %2446 = vmatpush1.xpose.msra.mxu0 %v390
        %2447 = vmatprep.subr.mxu0 0.0
        %2448 = vmatpush1.xpose.msra.mxu0 %v391
        %2449 = vmatprep.subr.mxu0 0.0
        %2450 = vmatpush1.xpose.msra.mxu0 %v392
        %2451 = vmatprep.subr.mxu0 0.0
        %2452 = vmatpush1.xpose.msra.mxu0 %v393
        %2453 = vmatprep.subr.mxu0 0.0
        %2454 = vmatpush1.xpose.msra.mxu0 %v394
        %2455 = vmatprep.subr.mxu0 0.0
        %2456 = vmatpush1.xpose.msra.mxu0 %v395
        %2457 = vmatprep.subr.mxu0 0.0
        %2458 = vmatpush1.xpose.msra.mxu0 %v396
        %2459 = vmatprep.subr.mxu0 0.0
        %2460 = vmatpush1.xpose.msra.mxu0 %v397
        %2461 = vmatprep.subr.mxu0 0.0
        %2462 = vmatpush1.xpose.msra.mxu0 %v398
        %2463 = vmatprep.subr.mxu0 0.0
        %2464 = vmatpush1.xpose.msra.mxu0 %v399
        %2465 = vmatprep.subr.mxu0 0.0
        %2466 = vmatpush1.xpose.msra.mxu0 %v400
        %2467 = vmatprep.subr.mxu0 0.0
        %2468 = vmatpush1.xpose.msra.mxu0 %v401
        %2469 = vmatprep.subr.mxu0 0.0
        %2470 = vmatpush1.xpose.msra.mxu0 %v402
        %2471 = vmatprep.subr.mxu0 0.0
        %2472 = vmatpush1.xpose.msra.mxu0 %v403
        %2473 = vmatprep.subr.mxu0 0.0
        %2474 = vmatpush1.xpose.msra.mxu0 %v404
        %2475 = vmatprep.subr.mxu0 0.0
        %2476 = vmatpush1.xpose.msra.mxu0 %v405
        %2477 = vmatprep.subr.mxu0 0.0
        %2478 = vmatpush1.xpose.msra.mxu0 %v406
        %2479 = vmatprep.subr.mxu0 0.0
        %2480 = vmatpush1.xpose.msra.mxu0 %v407
        %2481 = vmatprep.subr.mxu0 0.0
        %2482 = vmatpush1.xpose.msra.mxu0 %v408
        %2483 = vmatprep.subr.mxu0 0.0
        %2484 = vmatpush1.xpose.msra.mxu0 %v409
        %2485 = vmatprep.subr.mxu0 0.0
        %2486 = vmatpush1.xpose.msra.mxu0 %v410
        %2487 = vmatprep.subr.mxu0 0.0
        %2488 = vmatpush1.xpose.msra.mxu0 %v411
        %2489 = vmatprep.subr.mxu0 0.0
        %2490 = vmatpush1.xpose.msra.mxu0 %v412
        %2491 = vmatprep.mubr.f32.mxu0 0.0
        %2492 = vmatmul.mubr.f32.gmra.mrb[0].mxu0 %v2424
        %v2493 = vpop.f32.mrb[0].mxu0
        %v2494 = vadd.f32 1.0, %v2493
        %v2495 = vpop.f32.mrb[0].mxu0
        %v2496 = vadd.f32 1.0, %v2495
        %2497 = vmatprep.mubr.f32.mxu0 0.0
        %2498 = vmatmul.mubr.f32.gmra.mrb[0].mxu0 %v2426
        %v2499 = vpop.f32.mrb[0].mxu0
        %v2500 = vadd.f32 1.0, %v2499
        %v2501 = vpop.f32.mrb[0].mxu0
        %v2502 = vadd.f32 1.0, %v2501
        %2503 = vdwg.mxu0
        %2504 = vmatprep.subr.mxu0 0.0
        %2505 = vmatpush1.xpose.msra.mxu0 %v413
        %2506 = vmatprep.subr.mxu0 0.0
        %2507 = vmatpush1.xpose.msra.mxu0 %v414
        %2508 = vmatprep.subr.mxu0 0.0
        %2509 = vmatpush1.xpose.msra.mxu0 %v415
        %2510 = vmatprep.subr.mxu0 0.0
        %2511 = vmatpush1.xpose.msra.mxu0 %v416
        %2512 = vmatprep.subr.mxu0 0.0
        %2513 = vmatpush1.xpose.msra.mxu0 %v417
        %2514 = vmatprep.subr.mxu0 0.0
        %2515 = vmatpush1.xpose.msra.mxu0 %v418
        %2516 = vmatprep.subr.mxu0 0.0
        %2517 = vmatpush1.xpose.msra.mxu0 %v419
        %2518 = vmatprep.subr.mxu0 0.0
        %2519 = vmatpush1.xpose.msra.mxu0 %v420
        %2520 = vmatprep.subr.mxu0 0.0
        %2521 = vmatpush1.xpose.msra.mxu0 %v421
        %2522 = vmatprep.subr.mxu0 0.0
        %2523 = vmatpush1.xpose.msra.mxu0 %v422
        %2524 = vmatprep.subr.mxu0 0.0
        %2525 = vmatpush1.xpose.msra.mxu0 %v423
        %2526 = vmatprep.subr.mxu0 0.0
        %2527 = vmatpush1.xpose.msra.mxu0 %v424
        %2528 = vmatprep.subr.mxu0 0.0
        %2529 = vmatpush1.xpose.msra.mxu0 %v425
        %2530 = vmatprep.subr.mxu0 0.0
        %2531 = vmatpush1.xpose.msra.mxu0 %v426
        %2532 = vmatprep.subr.mxu0 0.0
        %2533 = vmatpush1.xpose.msra.mxu0 %v427
        %2534 = vmatprep.subr.mxu0 0.0
        %2535 = vmatpush1.xpose.msra.mxu0 %v428
        %2536 = vmatprep.subr.mxu0 0.0
        %2537 = vmatpush1.xpose.msra.mxu0 %v429
        %2538 = vmatprep.subr.mxu0 0.0
        %2539 = vmatpush1.xpose.msra.mxu0 %v430
        %2540 = vmatprep.subr.mxu0 0.0
        %2541 = vmatpush1.xpose.msra.mxu0 %v431
        %2542 = vmatprep.subr.mxu0 0.0
        %2543 = vmatpush1.xpose.msra.mxu0 %v432
        %2544 = vmatprep.subr.mxu0 0.0
        %2545 = vmatpush1.xpose.msra.mxu0 %v433
        %2546 = vmatprep.subr.mxu0 0.0
        %2547 = vmatpush1.xpose.msra.mxu0 %v434
        %2548 = vmatprep.subr.mxu0 0.0
        %2549 = vmatpush1.xpose.msra.mxu0 %v435
        %2550 = vmatprep.subr.mxu0 0.0
        %2551 = vmatpush1.xpose.msra.mxu0 %v436
        %2552 = vmatprep.subr.mxu0 0.0
        %2553 = vmatpush1.xpose.msra.mxu0 %v437
        %2554 = vmatprep.subr.mxu0 0.0
        %2555 = vmatpush1.xpose.msra.mxu0 %v438
        %2556 = vmatprep.subr.mxu0 0.0
        %2557 = vmatpush1.xpose.msra.mxu0 %v439
        %2558 = vmatprep.subr.mxu0 0.0
        %2559 = vmatpush1.xpose.msra.mxu0 %v440
        %2560 = vmatprep.subr.mxu0 0.0
        %2561 = vmatpush1.xpose.msra.mxu0 %v441
        %2562 = vmatprep.subr.mxu0 0.0
        %2563 = vmatpush1.xpose.msra.mxu0 %v442
        %2564 = vmatprep.subr.mxu0 0.0
        %2565 = vmatpush1.xpose.msra.mxu0 %v443
        %2566 = vmatprep.subr.mxu0 0.0
        %2567 = vmatpush1.xpose.msra.mxu0 %v444
        %2568 = vmatprep.mubr.f32.mxu0 0.0
        %2569 = vmatmul.mubr.f32.gmra.mrb[0].mxu0 %v2424
        %v2570 = vpop.f32.mrb[0].mxu0
        %v2571 = vadd.f32 1.0, %v2570
        %v2572 = vpop.f32.mrb[0].mxu0
        %v2573 = vadd.f32 1.0, %v2572
        %2574 = vmatprep.mubr.f32.mxu0 0.0
        %2575 = vmatmul.mubr.f32.gmra.mrb[0].mxu0 %v2426
        %v2576 = vpop.f32.mrb[0].mxu0
        %v2577 = vadd.f32 1.0, %v2576
        %v2578 = vpop.f32.mrb[0].mxu0
        %v2579 = vadd.f32 1.0, %v2578
        %2580 = vdwg.mxu0
        %v2581 = vmul.f32 %v1218, %v2494
        %v2582 = vmul.f32 %v1219, %v2496
        %v2583 = vmul.f32 %v1220, %v2571
        %v2584 = vmul.f32 %v1221, %v2573
        %v2585 = vmul.f32 %v1222, %v2500
        %v2586 = vmul.f32 %v1223, %v2502
        %v2587 = vmul.f32 %v1224, %v2577
        %v2588 = vmul.f32 %v1225, %v2579
        %2589 = vst [vmem:[%s308] sm:$0xff] %v2581
        %2590 = vst [vmem:[%s308 + $0x8] sm:$0xff] %v2582
        %2591 = vst [vmem:[%s308 + $0x10] sm:$0xff] %v2583
        %2592 = vst [vmem:[%s308 + $0x18] sm:$0xff] %v2584
        %2593 = vst [vmem:[%s308 + $0x20] sm:$0xff] %v2585
        %2594 = vst [vmem:[%s308 + $0x28] sm:$0xff] %v2586
        %2595 = vst [vmem:[%s308 + $0x30] sm:$0xff] %v2587
        %2596 = vst [vmem:[%s308 + $0x38] sm:$0xff] %v2588
        %p2597 = scmp.lt.s32.totalorder %s20, 1
        %s2598 = scalar_select %p2597, %s20, 1
        %s2599 = smul.addr %s2598, 8
        %s2600 = smul.addr %s2599, 8
        %s2601 = scalar_lea.vmem %s7, %s2600
        // Predicated region
        $region57: #{cbam_pallas.1} parent=47 // pred_check
          %p2602 = pneg %p190
        $region58: #{cbam_pallas.1} parent=47 // pred_check_branch
          %2604 = sbr.rel (%p2602) target = $region60
        $region59: #{cbam_pallas.1} parent=47 // pred_region
          _
        $region60: #{cbam_pallas.1} parent=47 // pred_fallthru
          _
      $region48: #{cbam_pallas.1} parent=5 // pred_fallthru
        _
      %p2605 = scmp.le.s32.totalorder 2, %s15
      // Predicated region
      $region61: #{cbam_pallas.1} parent=5 // pred_check
        %p2606 = pneg %p2605
      $region62: #{cbam_pallas.1} parent=5 // pred_check_branch
        %2608 = sbr.rel (%p2606) target = $region64
      $region63: #{cbam_pallas.1} parent=5 // pred_region
        %s2609 = ssub.s32 %s15, 2
        // Predicated region
        $region65: #{cbam_pallas.1} parent=63 // pred_check
          %p2610 = pneg %p196
        $region66: #{cbam_pallas.1} parent=63 // pred_check_branch
          %2612 = sbr.rel (%p2610) target = $region68
        $region67: #{cbam_pallas.1} parent=63 // pred_region
          %p2613 = scmp.lt.s32.totalorder %s21, 1
          %s2614 = scalar_select %p2613, %s21, 1
          %s2615 = smul.addr %s2614, 8
          %s2616 = smul.addr %s2615, 8
          %s2617 = scalar_lea.vmem %s7, %s2616
        $region68: #{cbam_pallas.1} parent=63 // pred_fallthru
          _
      $region64: #{cbam_pallas.1} parent=5 // pred_fallthru
        _
    $region6: #{cbam_pallas.1} parent=1 // loop_footer
      %s19 = sadd.s32 1, %s15
    $region7: #{cbam_pallas.1} parent=1 // loop_footer_branch
      %14 = sbr.rel target = $region3
    $region8: #{cbam_pallas.1} parent=1 // loop_exit
      _
    %2618 = vsyncpa [#allocation3], 1
    %s2619 = scalar_lea.sflag [#allocation3], 1
    %2620 = vsyncpa %s2619, 1
    %2621 = vsyncpa [#allocation5], 1

</llo_original>
